<compile_context>
chip_gen: v5e
topology: v5e:2x2
jax: 0.10.0
libtpu: 0.0.40
codegen_flags: <defaults>
</compile_context>

<pallas_src>
import jax
import jax.numpy as jnp
from jax import lax
from jax.experimental import pallas as pl
from jax.experimental.pallas import tpu as pltpu


def _round_up(x, m):
    return ((x + m - 1) // m) * m


def _pick_chunk(t, max_chunk=8):
    """Largest divisor of t that is <= max_chunk (bounds the in-chunk unroll)."""
    tc = 1
    for d in range(1, min(t, max_chunk) + 1):
        if t % d == 0:
            tc = d
    return tc


def _lstm_kernel(x_ref, h0_ref, c0_ref, wih_ref, whh_ref, whead_ref, bhead_ref,
                 out_ref, h_out_ref, c_out_ref,
                 xw_ref, h_sc, c_sc):
    """One T-chunk of the LSTM recurrence (+ fused heads on the last chunk).

    x_ref    : [Tc*B, C+1] bf16  time-major chunk; last column is 1.0 (bias)
    h0/c0    : [B, H]      f32   initial state (consumed on chunk 0 only)
    wih_ref  : [C+1, 4H]   bf16  [W_ih^T ; (b_ih+b_hh)], packed gates [i|f|g|o]
    whh_ref  : [H, 4H]     bf16  W_hh^T, packed gates
    whead_ref: [H, 128]    bf16  col 0 = mu weights, col 1 = pre-sigma weights
    bhead_ref: [1, 128]    f32
    out_ref  : [B, 128]    f32   col 0 = mu, col 1 = softplus(pre_sigma)
    h_out/c_out : [B, H]   f32   final LSTM state
    xw_ref   : [Tc*B, 4H]  f32   scratch: per-chunk hoisted input projection
    h_sc     : [B, H]      bf16  scratch: hidden carry across chunks
    c_sc     : [B, H]      f32   scratch: cell carry across chunks
    """
    B, H = h0_ref.shape
    Tc = x_ref.shape[0] // B
    chunk = pl.program_id(0)
    nchunks = pl.num_programs(0)

    @pl.when(chunk == 0)
    def _():
        h_sc[...] = h0_ref[...].astype(jnp.bfloat16)
        c_sc[...] = c0_ref[...]

    # Hoisted input projection for the whole chunk; bias folded in via the ones
    # column of x: xW = [x | 1] @ [W_ih^T ; b]  (one MXU matmul, f32 accumulate).
    xw_ref[...] = jnp.dot(x_ref[...], wih_ref[...],
                          preferred_element_type=jnp.float32)

    # Loop-invariant mask for the g-gate (tanh) block of the packed gate vector.
    col = lax.broadcasted_iota(jnp.int32, (B, 4 * H), 1)
    is_g = (col >= 2 * H) & (col < 3 * H)

    def step(t, carry):
        h_bf, c = carry                                    # bf16 [B,H], f32 [B,H]
        base = pl.multiple_of(t * B, B)
        gates = xw_ref[pl.ds(base, B), :] + jnp.dot(
            h_bf, whh_ref[...], preferred_element_type=jnp.float32)   # [B,4H] f32
        # One EUP pass for all four gates: sigmoid(x) = 0.5 + 0.5*tanh(0.5*x).
        t_all = jnp.tanh(jnp.where(is_g, gates, 0.5 * gates))
        act = jnp.where(is_g, t_all, 0.5 * t_all + 0.5)               # [i|f|g|o]
        i_a = act[:, 0 * H:1 * H]
        f_a = act[:, 1 * H:2 * H]
        g_a = act[:, 2 * H:3 * H]
        o_a = act[:, 3 * H:4 * H]
        c_new = f_a * c + i_a * g_a
        h_new = (o_a * jnp.tanh(c_new)).astype(jnp.bfloat16)
        return h_new, c_new

    # Bounded unroll: only Tc (<= 8) steps per grid iteration.
    h_bf, c = lax.fori_loop(0, Tc, step, (h_sc[...], c_sc[...]), unroll=True)
    h_sc[...] = h_bf
    c_sc[...] = c

    @pl.when(chunk == nchunks - 1)
    def _():
        h_out_ref[...] = h_bf.astype(jnp.float32)
        c_out_ref[...] = c
        # Fused mu / pre-sigma heads: one [B,H] x [H,128] matmul, lane-dense out.
        res = jnp.dot(h_bf, whead_ref[...],
                      preferred_element_type=jnp.float32) + bhead_ref[...]
        lane = lax.broadcasted_iota(jnp.int32, res.shape, 1)
        out_ref[...] = jnp.where(lane == 1, jax.nn.softplus(res), res)


@jax.jit
def vanilla_lstm_forward(x, hidden, cell, params):
    """x: [B, T, C] (batch_first), hidden/cell: [1, B, H].

    Returns (output [B, 2] = [mu, sigma], hidden [1, B, H], cell [1, B, H]),
    matching Vanilla_LSTM.forward with normalize=False, output_scheme='mu_sigma'.
    """
    B, T, C = x.shape
    H = hidden.shape[-1]
    Bp = _round_up(B, 8)            # full sublane tiles
    Tc = _pick_chunk(T, 8)          # bounded in-chunk unroll
    nchunks = T // Tc
    NP = 128                        # lane-dense head-output width

    # Batch-pad (rows are independent; padded rows are sliced away below).
    x_p = jnp.zeros((Bp, T, C), jnp.float32).at[:B].set(x.astype(jnp.float32))
    h0 = jnp.zeros((Bp, H), jnp.float32).at[:B].set(hidden[0].astype(jnp.float32))
    c0 = jnp.zeros((Bp, H), jnp.float32).at[:B].set(cell[0].astype(jnp.float32))

    # Time-major flat input with a ones column (folds the combined gate bias
    # into the projection matmul); bf16 MXU operands.
    x_tm = jnp.transpose(x_p, (1, 0, 2)).reshape(T * Bp, C)
    x_aug = jnp.concatenate([x_tm, jnp.ones((T * Bp, 1), jnp.float32)],
                            axis=1).astype(jnp.bfloat16)               # [T*Bp, C+1]

    # W_ih^T with the combined bias appended as the last row: [C+1, 4H].
    bias = (params["b_ih"] + params["b_hh"])[None, :]
    wih_aug = jnp.concatenate([params["w_ih"].T, bias],
                              axis=0).astype(jnp.bfloat16)
    whh_t = params["w_hh"].T.astype(jnp.bfloat16)                       # [H, 4H]

    # Fused heads: [H, 128] (col 0 = mu, col 1 = pre-sigma), bias [1, 128].
    w_head = (jnp.zeros((H, NP), jnp.float32)
              .at[:, 0].set(params["w_mu"][0])
              .at[:, 1].set(params["w_ps"][0])).astype(jnp.bfloat16)
    b_head = (jnp.zeros((1, NP), jnp.float32)
              .at[0, 0].set(params["b_mu"][0])
              .at[0, 1].set(params["b_ps"][0]))

    out_shapes = (
        jax.ShapeDtypeStruct((Bp, NP), jnp.float32),
        jax.ShapeDtypeStruct((Bp, H), jnp.float32),
        jax.ShapeDtypeStruct((Bp, H), jnp.float32),
    )

    out, h_new, c_new = pl.pallas_call(
        _lstm_kernel,
        out_shape=out_shapes,
        grid_spec=pltpu.PrefetchScalarGridSpec(
            num_scalar_prefetch=0,
            grid=(nchunks,),
            in_specs=[
                pl.BlockSpec((Tc * Bp, C + 1), lambda i: (i, 0)),  # x chunk (pipelined)
                pl.BlockSpec((Bp, H), lambda i: (0, 0)),           # h0
                pl.BlockSpec((Bp, H), lambda i: (0, 0)),           # c0
                pl.BlockSpec((C + 1, 4 * H), lambda i: (0, 0)),    # [W_ih^T ; b]
                pl.BlockSpec((H, 4 * H), lambda i: (0, 0)),        # W_hh^T
                pl.BlockSpec((H, NP), lambda i: (0, 0)),           # head weights
                pl.BlockSpec((1, NP), lambda i: (0, 0)),           # head bias
            ],
            out_specs=(
                pl.BlockSpec((Bp, NP), lambda i: (0, 0)),
                pl.BlockSpec((Bp, H), lambda i: (0, 0)),
                pl.BlockSpec((Bp, H), lambda i: (0, 0)),
            ),
            scratch_shapes=[
                pltpu.VMEM((Tc * Bp, 4 * H), jnp.float32),   # per-chunk xW
                pltpu.VMEM((Bp, H), jnp.bfloat16),           # h carry
                pltpu.VMEM((Bp, H), jnp.float32),            # c carry
            ],
        ),
        compiler_params=pltpu.CompilerParams(
            dimension_semantics=("arbitrary",)),
    )(x_aug, h0, c0, wih_aug, whh_t, w_head, b_head)

    return out[:B, :2], h_new[None, :B, :], c_new[None, :B, :]


def _reference_forward(x, hidden, cell, params):
    """Pure-JAX f32 reference (same semantics as the PyTorch module, normalize=False)."""
    B, T, C = x.shape
    H = hidden.shape[-1]
    h, c = hidden[0], cell[0]
    wih, whh = params["w_ih"], params["w_hh"]
    b = params["b_ih"] + params["b_hh"]
    for t in range(T):
        g = x[:, t, :] @ wih.T + h @ whh.T + b
        i = jax.nn.sigmoid(g[:, 0 * H:1 * H])
        f = jax.nn.sigmoid(g[:, 1 * H:2 * H])
        gg = jnp.tanh(g[:, 2 * H:3 * H])
        o = jax.nn.sigmoid(g[:, 3 * H:4 * H])
        c = f * c + i * gg
        h = o * jnp.tanh(c)
    mu = h @ params["w_mu"].T + params["b_mu"]
    sigma = jax.nn.softplus(h @ params["w_ps"].T + params["b_ps"])
    return jnp.concatenate([mu, sigma], axis=1), h[None], c[None]


def init_params(key, cov_dim, hidden_dim):
    """Deterministic init matching nn.LSTM / nn.Linear shapes.

    nn.LSTM: uniform(-1/sqrt(H), 1/sqrt(H)); forget-gate slice [H:2H] of each
    bias is filled with 1.0, as in the module's __init__.
    """
    k = 1.0 / jnp.sqrt(hidden_dim)
    keys = jax.random.split(key, 8)
    w_ih = jax.random.uniform(keys[0], (4 * hidden_dim, cov_dim), jnp.float32, -k, k)
    w_hh = jax.random.uniform(keys[1], (4 * hidden_dim, hidden_dim), jnp.float32, -k, k)
    b_ih = jax.random.uniform(keys[2], (4 * hidden_dim,), jnp.float32, -k, k)
    b_hh = jax.random.uniform(keys[3], (4 * hidden_dim,), jnp.float32, -k, k)
    b_ih = b_ih.at[hidden_dim:2 * hidden_dim].set(1.0)
    b_hh = b_hh.at[hidden_dim:2 * hidden_dim].set(1.0)

    kl = 1.0 / jnp.sqrt(hidden_dim)  # nn.Linear(H*L, 1) init bound
    w_mu = jax.random.uniform(keys[4], (1, hidden_dim), jnp.float32, -kl, kl)
    b_mu = jax.random.uniform(keys[5], (1,), jnp.float32, -kl, kl)
    w_ps = jax.random.uniform(keys[6], (1, hidden_dim), jnp.float32, -kl, kl)
    b_ps = jax.random.uniform(keys[7], (1,), jnp.float32, -kl, kl)

    return dict(w_ih=w_ih, w_hh=w_hh, b_ih=b_ih, b_hh=b_hh,
                w_mu=w_mu, b_mu=b_mu, w_ps=w_ps, b_ps=b_ps)


if __name__ == "__main__":
    # B=8 fills a sublane tile; T=16 exercises the T-chunked grid (2 chunks of 8).
    B, T, COV_DIM, H = 8, 16, 4, 32

    key = jax.random.PRNGKey(0)
    kx, kh, kc, kp = jax.random.split(key, 4)
    x = jax.random.normal(kx, (B, T, COV_DIM), jnp.float32)
    hidden = jax.random.normal(kh, (1, B, H), jnp.float32)
    cell = jax.random.normal(kc, (1, B, H), jnp.float32)
    params = init_params(kp, COV_DIM, H)

    out, h_new, c_new = vanilla_lstm_forward(x, hidden, cell, params)
    jax.block_until_ready((out, h_new, c_new))

    assert out.shape == (B, 2)
    assert h_new.shape == (1, B, H)
    assert c_new.shape == (1, B, H)

    # Sanity check vs. pure-JAX f32 reference (kernel matmuls use bf16 operands,
    # and h is carried in bf16; c stays f32).
    ref_out, ref_h, ref_c = _reference_forward(x, hidden, cell, params)
    assert bool(jnp.all(jnp.isfinite(out)))
    assert bool(jnp.allclose(out, ref_out, atol=1e-1, rtol=1e-1))
    assert bool(jnp.allclose(h_new, ref_h, atol=1e-1, rtol=1e-1))
    assert bool(jnp.allclose(c_new, ref_c, atol=1e-1, rtol=1e-1))

    print("KERNEL_OK")
</pallas_src>

<mosaic_0001>
module attributes {stable_mosaic.version = 11 : i64} {
  func.func @_lstm_kernel(%arg0: i32, %arg1: memref<64x5xbf16, #tpu.memory_space<vmem>>, %arg2: memref<8x32xf32, #tpu.memory_space<vmem>>, %arg3: memref<8x32xf32, #tpu.memory_space<vmem>>, %arg4: memref<5x128xbf16, #tpu.memory_space<vmem>>, %arg5: memref<32x128xbf16, #tpu.memory_space<vmem>>, %arg6: memref<32x128xbf16, #tpu.memory_space<vmem>>, %arg7: memref<1x128xf32, #tpu.memory_space<vmem>>, %arg8: memref<8x128xf32, #tpu.memory_space<vmem>>, %arg9: memref<8x32xf32, #tpu.memory_space<vmem>>, %arg10: memref<8x32xf32, #tpu.memory_space<vmem>>, %arg11: memref<64x128xf32, #tpu.memory_space<vmem>>, %arg12: memref<8x32xbf16, #tpu.memory_space<vmem>>, %arg13: memref<8x32xf32, #tpu.memory_space<vmem>>) attributes {dimension_semantics = [#tpu.dimension_semantics<arbitrary>], iteration_bounds = array<i64: 2>, scalar_prefetch = 0 : i64, scratch_operands = 3 : i64, tpu.core_type = #tpu.core_type<tc>, window_params = [{transform_indices = @transform_0, window_bounds = array<i64: 64, 5>}, {pipeline_mode = #tpu.pipeline_mode<synchronous>, transform_indices = @transform_1, window_bounds = array<i64: 8, 32>}, {pipeline_mode = #tpu.pipeline_mode<synchronous>, transform_indices = @transform_2, window_bounds = array<i64: 8, 32>}, {pipeline_mode = #tpu.pipeline_mode<synchronous>, transform_indices = @transform_3, window_bounds = array<i64: 5, 128>}, {pipeline_mode = #tpu.pipeline_mode<synchronous>, transform_indices = @transform_4, window_bounds = array<i64: 32, 128>}, {pipeline_mode = #tpu.pipeline_mode<synchronous>, transform_indices = @transform_5, window_bounds = array<i64: 32, 128>}, {pipeline_mode = #tpu.pipeline_mode<synchronous>, transform_indices = @transform_6, window_bounds = array<i64: 1, 128>}, {pipeline_mode = #tpu.pipeline_mode<synchronous>, transform_indices = @transform_7, window_bounds = array<i64: 8, 128>}, {pipeline_mode = #tpu.pipeline_mode<synchronous>, transform_indices = @transform_8, window_bounds = array<i64: 8, 32>}, {pipeline_mode = #tpu.pipeline_mode<synchronous>, transform_indices = @transform_9, window_bounds = array<i64: 8, 32>}]} {
    %c0_i32 = arith.constant 0 : i32
    %0 = arith.cmpi eq, %arg0, %c0_i32 : i32
    %1 = arith.extui %0 : i1 to i32
    %c0_i32_0 = arith.constant 0 : i32
    %2 = arith.cmpi ne, %1, %c0_i32_0 : i32
    scf.if %2 {
      %c0_81 = arith.constant 0 : index
      %c0_82 = arith.constant 0 : index
      %228 = vector.load %arg2[%c0_81, %c0_82] : memref<8x32xf32, #tpu.memory_space<vmem>>, vector<8x32xf32>
      %229 = arith.truncf %228 : vector<8x32xf32> to vector<8x32xbf16>
      %c0_83 = arith.constant 0 : index
      %c0_84 = arith.constant 0 : index
      %230 = vector.load %arg12[%c0_83, %c0_84] : memref<8x32xbf16, #tpu.memory_space<vmem>>, vector<8x32xbf16>
      tpu.vector_store %arg12[%c0_83, %c0_84], %229 {strides = array<i32>} : memref<8x32xbf16, #tpu.memory_space<vmem>>, vector<8x32xbf16>,
      %c0_85 = arith.constant 0 : index
      %c0_86 = arith.constant 0 : index
      %231 = vector.load %arg3[%c0_85, %c0_86] : memref<8x32xf32, #tpu.memory_space<vmem>>, vector<8x32xf32>
      %c0_87 = arith.constant 0 : index
      %c0_88 = arith.constant 0 : index
      %232 = vector.load %arg13[%c0_87, %c0_88] : memref<8x32xf32, #tpu.memory_space<vmem>>, vector<8x32xf32>
      tpu.vector_store %arg13[%c0_87, %c0_88], %231 {strides = array<i32>} : memref<8x32xf32, #tpu.memory_space<vmem>>, vector<8x32xf32>,
    } else {
    }
    %c0 = arith.constant 0 : index
    %c0_1 = arith.constant 0 : index
    %3 = vector.load %arg1[%c0, %c0_1] : memref<64x5xbf16, #tpu.memory_space<vmem>>, vector<64x5xbf16>
    %c0_2 = arith.constant 0 : index
    %c0_3 = arith.constant 0 : index
    %4 = vector.load %arg4[%c0_2, %c0_3] : memref<5x128xbf16, #tpu.memory_space<vmem>>, vector<5x128xbf16>
    %cst = arith.constant dense<0.000000e+00> : vector<64x128xf32>
    %5 = tpu.matmul %3, %4, %cst {dimension_numbers = #tpu.dot_dimension_numbers<[1], [0], [0], [1], [0, 0, 1, 1], [], []>} : vector<64x5xbf16>, vector<5x128xbf16>, vector<64x128xf32> -> vector<64x128xf32>
    %c0_4 = arith.constant 0 : index
    %c0_5 = arith.constant 0 : index
    %6 = vector.load %arg11[%c0_4, %c0_5] : memref<64x128xf32, #tpu.memory_space<vmem>>, vector<64x128xf32>
    tpu.vector_store %arg11[%c0_4, %c0_5], %5 {strides = array<i32>} : memref<64x128xf32, #tpu.memory_space<vmem>>, vector<64x128xf32>,
    %7 = tpu.iota {dimensions = array<i32: 1>} : vector<8x128xi32>
    %c64_i32 = arith.constant 64 : i32
    %8 = vector.broadcast %c64_i32 : i32 to vector<8x128xi32>
    %9 = arith.cmpi sge, %7, %8 : vector<8x128xi32>
    %c96_i32 = arith.constant 96 : i32
    %10 = vector.broadcast %c96_i32 : i32 to vector<8x128xi32>
    %11 = arith.cmpi slt, %7, %10 : vector<8x128xi32>
    %12 = arith.andi %9, %11 : vector<8x128xi1>
    %c0_6 = arith.constant 0 : index
    %c0_7 = arith.constant 0 : index
    %13 = vector.load %arg12[%c0_6, %c0_7] : memref<8x32xbf16, #tpu.memory_space<vmem>>, vector<8x32xbf16>
    %c0_8 = arith.constant 0 : index
    %c0_9 = arith.constant 0 : index
    %14 = vector.load %arg13[%c0_8, %c0_9] : memref<8x32xf32, #tpu.memory_space<vmem>>, vector<8x32xf32>
    %c0_i32_10 = arith.constant 0 : i32
    %c8_i32 = arith.constant 8 : i32
    %15 = arith.muli %c0_i32_10, %c8_i32 : i32
    %16 = tpu.assume_multiple %15, 8 : i32
    %17 = arith.index_cast %16 : i32 to index
    %c0_11 = arith.constant 0 : index
    %18 = vector.load %arg11[%17, %c0_11] : memref<64x128xf32, #tpu.memory_space<vmem>>, vector<8x128xf32>
    %c0_12 = arith.constant 0 : index
    %c0_13 = arith.constant 0 : index
    %19 = vector.load %arg5[%c0_12, %c0_13] : memref<32x128xbf16, #tpu.memory_space<vmem>>, vector<32x128xbf16>
    %cst_14 = arith.constant dense<0.000000e+00> : vector<8x128xf32>
    %20 = tpu.matmul %13, %19, %cst_14 {dimension_numbers = #tpu.dot_dimension_numbers<[1], [0], [0], [1], [0, 0, 1, 1], [], []>} : vector<8x32xbf16>, vector<32x128xbf16>, vector<8x128xf32> -> vector<8x128xf32>
    %21 = arith.addf %18, %20 : vector<8x128xf32>
    %cst_15 = arith.constant 5.000000e-01 : f32
    %22 = vector.broadcast %cst_15 : f32 to vector<8x128xf32>
    %23 = arith.mulf %22, %21 : vector<8x128xf32>
    %24 = arith.select %12, %21, %23 : vector<8x128xi1>, vector<8x128xf32>
    %25 = math.tanh %24 : vector<8x128xf32>
    %cst_16 = arith.constant 5.000000e-01 : f32
    %26 = vector.broadcast %cst_16 : f32 to vector<8x128xf32>
    %27 = arith.mulf %26, %25 : vector<8x128xf32>
    %cst_17 = arith.constant 5.000000e-01 : f32
    %28 = vector.broadcast %cst_17 : f32 to vector<8x128xf32>
    %29 = arith.addf %27, %28 : vector<8x128xf32>
    %30 = arith.select %12, %25, %29 : vector<8x128xi1>, vector<8x128xf32>
    %31 = vector.extract_strided_slice %30 {offsets = [0, 0], sizes = [8, 32], strides = [1, 1]} : vector<8x128xf32> to vector<8x32xf32>
    %32 = vector.extract_strided_slice %30 {offsets = [0, 32], sizes = [8, 32], strides = [1, 1]} : vector<8x128xf32> to vector<8x32xf32>
    %33 = vector.extract_strided_slice %30 {offsets = [0, 64], sizes = [8, 32], strides = [1, 1]} : vector<8x128xf32> to vector<8x32xf32>
    %34 = vector.extract_strided_slice %30 {offsets = [0, 96], sizes = [8, 32], strides = [1, 1]} : vector<8x128xf32> to vector<8x32xf32>
    %35 = arith.mulf %32, %14 : vector<8x32xf32>
    %36 = arith.mulf %31, %33 : vector<8x32xf32>
    %37 = arith.addf %35, %36 : vector<8x32xf32>
    %38 = math.tanh %37 : vector<8x32xf32>
    %39 = arith.mulf %34, %38 : vector<8x32xf32>
    %40 = arith.truncf %39 : vector<8x32xf32> to vector<8x32xbf16>
    %c1_i32 = arith.constant 1 : i32
    %c8_i32_18 = arith.constant 8 : i32
    %41 = arith.muli %c1_i32, %c8_i32_18 : i32
    %42 = tpu.assume_multiple %41, 8 : i32
    %43 = arith.index_cast %42 : i32 to index
    %c0_19 = arith.constant 0 : index
    %44 = vector.load %arg11[%43, %c0_19] : memref<64x128xf32, #tpu.memory_space<vmem>>, vector<8x128xf32>
    %c0_20 = arith.constant 0 : index
    %c0_21 = arith.constant 0 : index
    %45 = vector.load %arg5[%c0_20, %c0_21] : memref<32x128xbf16, #tpu.memory_space<vmem>>, vector<32x128xbf16>
    %cst_22 = arith.constant dense<0.000000e+00> : vector<8x128xf32>
    %46 = tpu.matmul %40, %45, %cst_22 {dimension_numbers = #tpu.dot_dimension_numbers<[1], [0], [0], [1], [0, 0, 1, 1], [], []>} : vector<8x32xbf16>, vector<32x128xbf16>, vector<8x128xf32> -> vector<8x128xf32>
    %47 = arith.addf %44, %46 : vector<8x128xf32>
    %cst_23 = arith.constant 5.000000e-01 : f32
    %48 = vector.broadcast %cst_23 : f32 to vector<8x128xf32>
    %49 = arith.mulf %48, %47 : vector<8x128xf32>
    %50 = arith.select %12, %47, %49 : vector<8x128xi1>, vector<8x128xf32>
    %51 = math.tanh %50 : vector<8x128xf32>
    %cst_24 = arith.constant 5.000000e-01 : f32
    %52 = vector.broadcast %cst_24 : f32 to vector<8x128xf32>
    %53 = arith.mulf %52, %51 : vector<8x128xf32>
    %cst_25 = arith.constant 5.000000e-01 : f32
    %54 = vector.broadcast %cst_25 : f32 to vector<8x128xf32>
    %55 = arith.addf %53, %54 : vector<8x128xf32>
    %56 = arith.select %12, %51, %55 : vector<8x128xi1>, vector<8x128xf32>
    %57 = vector.extract_strided_slice %56 {offsets = [0, 0], sizes = [8, 32], strides = [1, 1]} : vector<8x128xf32> to vector<8x32xf32>
    %58 = vector.extract_strided_slice %56 {offsets = [0, 32], sizes = [8, 32], strides = [1, 1]} : vector<8x128xf32> to vector<8x32xf32>
    %59 = vector.extract_strided_slice %56 {offsets = [0, 64], sizes = [8, 32], strides = [1, 1]} : vector<8x128xf32> to vector<8x32xf32>
    %60 = vector.extract_strided_slice %56 {offsets = [0, 96], sizes = [8, 32], strides = [1, 1]} : vector<8x128xf32> to vector<8x32xf32>
    %61 = arith.mulf %58, %37 : vector<8x32xf32>
    %62 = arith.mulf %57, %59 : vector<8x32xf32>
    %63 = arith.addf %61, %62 : vector<8x32xf32>
    %64 = math.tanh %63 : vector<8x32xf32>
    %65 = arith.mulf %60, %64 : vector<8x32xf32>
    %66 = arith.truncf %65 : vector<8x32xf32> to vector<8x32xbf16>
    %c2_i32 = arith.constant 2 : i32
    %c8_i32_26 = arith.constant 8 : i32
    %67 = arith.muli %c2_i32, %c8_i32_26 : i32
    %68 = tpu.assume_multiple %67, 8 : i32
    %69 = arith.index_cast %68 : i32 to index
    %c0_27 = arith.constant 0 : index
    %70 = vector.load %arg11[%69, %c0_27] : memref<64x128xf32, #tpu.memory_space<vmem>>, vector<8x128xf32>
    %c0_28 = arith.constant 0 : index
    %c0_29 = arith.constant 0 : index
    %71 = vector.load %arg5[%c0_28, %c0_29] : memref<32x128xbf16, #tpu.memory_space<vmem>>, vector<32x128xbf16>
    %cst_30 = arith.constant dense<0.000000e+00> : vector<8x128xf32>
    %72 = tpu.matmul %66, %71, %cst_30 {dimension_numbers = #tpu.dot_dimension_numbers<[1], [0], [0], [1], [0, 0, 1, 1], [], []>} : vector<8x32xbf16>, vector<32x128xbf16>, vector<8x128xf32> -> vector<8x128xf32>
    %73 = arith.addf %70, %72 : vector<8x128xf32>
    %cst_31 = arith.constant 5.000000e-01 : f32
    %74 = vector.broadcast %cst_31 : f32 to vector<8x128xf32>
    %75 = arith.mulf %74, %73 : vector<8x128xf32>
    %76 = arith.select %12, %73, %75 : vector<8x128xi1>, vector<8x128xf32>
    %77 = math.tanh %76 : vector<8x128xf32>
    %cst_32 = arith.constant 5.000000e-01 : f32
    %78 = vector.broadcast %cst_32 : f32 to vector<8x128xf32>
    %79 = arith.mulf %78, %77 : vector<8x128xf32>
    %cst_33 = arith.constant 5.000000e-01 : f32
    %80 = vector.broadcast %cst_33 : f32 to vector<8x128xf32>
    %81 = arith.addf %79, %80 : vector<8x128xf32>
    %82 = arith.select %12, %77, %81 : vector<8x128xi1>, vector<8x128xf32>
    %83 = vector.extract_strided_slice %82 {offsets = [0, 0], sizes = [8, 32], strides = [1, 1]} : vector<8x128xf32> to vector<8x32xf32>
    %84 = vector.extract_strided_slice %82 {offsets = [0, 32], sizes = [8, 32], strides = [1, 1]} : vector<8x128xf32> to vector<8x32xf32>
    %85 = vector.extract_strided_slice %82 {offsets = [0, 64], sizes = [8, 32], strides = [1, 1]} : vector<8x128xf32> to vector<8x32xf32>
    %86 = vector.extract_strided_slice %82 {offsets = [0, 96], sizes = [8, 32], strides = [1, 1]} : vector<8x128xf32> to vector<8x32xf32>
    %87 = arith.mulf %84, %63 : vector<8x32xf32>
    %88 = arith.mulf %83, %85 : vector<8x32xf32>
    %89 = arith.addf %87, %88 : vector<8x32xf32>
    %90 = math.tanh %89 : vector<8x32xf32>
    %91 = arith.mulf %86, %90 : vector<8x32xf32>
    %92 = arith.truncf %91 : vector<8x32xf32> to vector<8x32xbf16>
    %c3_i32 = arith.constant 3 : i32
    %c8_i32_34 = arith.constant 8 : i32
    %93 = arith.muli %c3_i32, %c8_i32_34 : i32
    %94 = tpu.assume_multiple %93, 8 : i32
    %95 = arith.index_cast %94 : i32 to index
    %c0_35 = arith.constant 0 : index
    %96 = vector.load %arg11[%95, %c0_35] : memref<64x128xf32, #tpu.memory_space<vmem>>, vector<8x128xf32>
    %c0_36 = arith.constant 0 : index
    %c0_37 = arith.constant 0 : index
    %97 = vector.load %arg5[%c0_36, %c0_37] : memref<32x128xbf16, #tpu.memory_space<vmem>>, vector<32x128xbf16>
    %cst_38 = arith.constant dense<0.000000e+00> : vector<8x128xf32>
    %98 = tpu.matmul %92, %97, %cst_38 {dimension_numbers = #tpu.dot_dimension_numbers<[1], [0], [0], [1], [0, 0, 1, 1], [], []>} : vector<8x32xbf16>, vector<32x128xbf16>, vector<8x128xf32> -> vector<8x128xf32>
    %99 = arith.addf %96, %98 : vector<8x128xf32>
    %cst_39 = arith.constant 5.000000e-01 : f32
    %100 = vector.broadcast %cst_39 : f32 to vector<8x128xf32>
    %101 = arith.mulf %100, %99 : vector<8x128xf32>
    %102 = arith.select %12, %99, %101 : vector<8x128xi1>, vector<8x128xf32>
    %103 = math.tanh %102 : vector<8x128xf32>
    %cst_40 = arith.constant 5.000000e-01 : f32
    %104 = vector.broadcast %cst_40 : f32 to vector<8x128xf32>
    %105 = arith.mulf %104, %103 : vector<8x128xf32>
    %cst_41 = arith.constant 5.000000e-01 : f32
    %106 = vector.broadcast %cst_41 : f32 to vector<8x128xf32>
    %107 = arith.addf %105, %106 : vector<8x128xf32>
    %108 = arith.select %12, %103, %107 : vector<8x128xi1>, vector<8x128xf32>
    %109 = vector.extract_strided_slice %108 {offsets = [0, 0], sizes = [8, 32], strides = [1, 1]} : vector<8x128xf32> to vector<8x32xf32>
    %110 = vector.extract_strided_slice %108 {offsets = [0, 32], sizes = [8, 32], strides = [1, 1]} : vector<8x128xf32> to vector<8x32xf32>
    %111 = vector.extract_strided_slice %108 {offsets = [0, 64], sizes = [8, 32], strides = [1, 1]} : vector<8x128xf32> to vector<8x32xf32>
    %112 = vector.extract_strided_slice %108 {offsets = [0, 96], sizes = [8, 32], strides = [1, 1]} : vector<8x128xf32> to vector<8x32xf32>
    %113 = arith.mulf %110, %89 : vector<8x32xf32>
    %114 = arith.mulf %109, %111 : vector<8x32xf32>
    %115 = arith.addf %113, %114 : vector<8x32xf32>
    %116 = math.tanh %115 : vector<8x32xf32>
    %117 = arith.mulf %112, %116 : vector<8x32xf32>
    %118 = arith.truncf %117 : vector<8x32xf32> to vector<8x32xbf16>
    %c4_i32 = arith.constant 4 : i32
    %c8_i32_42 = arith.constant 8 : i32
    %119 = arith.muli %c4_i32, %c8_i32_42 : i32
    %120 = tpu.assume_multiple %119, 8 : i32
    %121 = arith.index_cast %120 : i32 to index
    %c0_43 = arith.constant 0 : index
    %122 = vector.load %arg11[%121, %c0_43] : memref<64x128xf32, #tpu.memory_space<vmem>>, vector<8x128xf32>
    %c0_44 = arith.constant 0 : index
    %c0_45 = arith.constant 0 : index
    %123 = vector.load %arg5[%c0_44, %c0_45] : memref<32x128xbf16, #tpu.memory_space<vmem>>, vector<32x128xbf16>
    %cst_46 = arith.constant dense<0.000000e+00> : vector<8x128xf32>
    %124 = tpu.matmul %118, %123, %cst_46 {dimension_numbers = #tpu.dot_dimension_numbers<[1], [0], [0], [1], [0, 0, 1, 1], [], []>} : vector<8x32xbf16>, vector<32x128xbf16>, vector<8x128xf32> -> vector<8x128xf32>
    %125 = arith.addf %122, %124 : vector<8x128xf32>
    %cst_47 = arith.constant 5.000000e-01 : f32
    %126 = vector.broadcast %cst_47 : f32 to vector<8x128xf32>
    %127 = arith.mulf %126, %125 : vector<8x128xf32>
    %128 = arith.select %12, %125, %127 : vector<8x128xi1>, vector<8x128xf32>
    %129 = math.tanh %128 : vector<8x128xf32>
    %cst_48 = arith.constant 5.000000e-01 : f32
    %130 = vector.broadcast %cst_48 : f32 to vector<8x128xf32>
    %131 = arith.mulf %130, %129 : vector<8x128xf32>
    %cst_49 = arith.constant 5.000000e-01 : f32
    %132 = vector.broadcast %cst_49 : f32 to vector<8x128xf32>
    %133 = arith.addf %131, %132 : vector<8x128xf32>
    %134 = arith.select %12, %129, %133 : vector<8x128xi1>, vector<8x128xf32>
    %135 = vector.extract_strided_slice %134 {offsets = [0, 0], sizes = [8, 32], strides = [1, 1]} : vector<8x128xf32> to vector<8x32xf32>
    %136 = vector.extract_strided_slice %134 {offsets = [0, 32], sizes = [8, 32], strides = [1, 1]} : vector<8x128xf32> to vector<8x32xf32>
    %137 = vector.extract_strided_slice %134 {offsets = [0, 64], sizes = [8, 32], strides = [1, 1]} : vector<8x128xf32> to vector<8x32xf32>
    %138 = vector.extract_strided_slice %134 {offsets = [0, 96], sizes = [8, 32], strides = [1, 1]} : vector<8x128xf32> to vector<8x32xf32>
    %139 = arith.mulf %136, %115 : vector<8x32xf32>
    %140 = arith.mulf %135, %137 : vector<8x32xf32>
    %141 = arith.addf %139, %140 : vector<8x32xf32>
    %142 = math.tanh %141 : vector<8x32xf32>
    %143 = arith.mulf %138, %142 : vector<8x32xf32>
    %144 = arith.truncf %143 : vector<8x32xf32> to vector<8x32xbf16>
    %c5_i32 = arith.constant 5 : i32
    %c8_i32_50 = arith.constant 8 : i32
    %145 = arith.muli %c5_i32, %c8_i32_50 : i32
    %146 = tpu.assume_multiple %145, 8 : i32
    %147 = arith.index_cast %146 : i32 to index
    %c0_51 = arith.constant 0 : index
    %148 = vector.load %arg11[%147, %c0_51] : memref<64x128xf32, #tpu.memory_space<vmem>>, vector<8x128xf32>
    %c0_52 = arith.constant 0 : index
    %c0_53 = arith.constant 0 : index
    %149 = vector.load %arg5[%c0_52, %c0_53] : memref<32x128xbf16, #tpu.memory_space<vmem>>, vector<32x128xbf16>
    %cst_54 = arith.constant dense<0.000000e+00> : vector<8x128xf32>
    %150 = tpu.matmul %144, %149, %cst_54 {dimension_numbers = #tpu.dot_dimension_numbers<[1], [0], [0], [1], [0, 0, 1, 1], [], []>} : vector<8x32xbf16>, vector<32x128xbf16>, vector<8x128xf32> -> vector<8x128xf32>
    %151 = arith.addf %148, %150 : vector<8x128xf32>
    %cst_55 = arith.constant 5.000000e-01 : f32
    %152 = vector.broadcast %cst_55 : f32 to vector<8x128xf32>
    %153 = arith.mulf %152, %151 : vector<8x128xf32>
    %154 = arith.select %12, %151, %153 : vector<8x128xi1>, vector<8x128xf32>
    %155 = math.tanh %154 : vector<8x128xf32>
    %cst_56 = arith.constant 5.000000e-01 : f32
    %156 = vector.broadcast %cst_56 : f32 to vector<8x128xf32>
    %157 = arith.mulf %156, %155 : vector<8x128xf32>
    %cst_57 = arith.constant 5.000000e-01 : f32
    %158 = vector.broadcast %cst_57 : f32 to vector<8x128xf32>
    %159 = arith.addf %157, %158 : vector<8x128xf32>
    %160 = arith.select %12, %155, %159 : vector<8x128xi1>, vector<8x128xf32>
    %161 = vector.extract_strided_slice %160 {offsets = [0, 0], sizes = [8, 32], strides = [1, 1]} : vector<8x128xf32> to vector<8x32xf32>
    %162 = vector.extract_strided_slice %160 {offsets = [0, 32], sizes = [8, 32], strides = [1, 1]} : vector<8x128xf32> to vector<8x32xf32>
    %163 = vector.extract_strided_slice %160 {offsets = [0, 64], sizes = [8, 32], strides = [1, 1]} : vector<8x128xf32> to vector<8x32xf32>
    %164 = vector.extract_strided_slice %160 {offsets = [0, 96], sizes = [8, 32], strides = [1, 1]} : vector<8x128xf32> to vector<8x32xf32>
    %165 = arith.mulf %162, %141 : vector<8x32xf32>
    %166 = arith.mulf %161, %163 : vector<8x32xf32>
    %167 = arith.addf %165, %166 : vector<8x32xf32>
    %168 = math.tanh %167 : vector<8x32xf32>
    %169 = arith.mulf %164, %168 : vector<8x32xf32>
    %170 = arith.truncf %169 : vector<8x32xf32> to vector<8x32xbf16>
    %c6_i32 = arith.constant 6 : i32
    %c8_i32_58 = arith.constant 8 : i32
    %171 = arith.muli %c6_i32, %c8_i32_58 : i32
    %172 = tpu.assume_multiple %171, 8 : i32
    %173 = arith.index_cast %172 : i32 to index
    %c0_59 = arith.constant 0 : index
    %174 = vector.load %arg11[%173, %c0_59] : memref<64x128xf32, #tpu.memory_space<vmem>>, vector<8x128xf32>
    %c0_60 = arith.constant 0 : index
    %c0_61 = arith.constant 0 : index
    %175 = vector.load %arg5[%c0_60, %c0_61] : memref<32x128xbf16, #tpu.memory_space<vmem>>, vector<32x128xbf16>
    %cst_62 = arith.constant dense<0.000000e+00> : vector<8x128xf32>
    %176 = tpu.matmul %170, %175, %cst_62 {dimension_numbers = #tpu.dot_dimension_numbers<[1], [0], [0], [1], [0, 0, 1, 1], [], []>} : vector<8x32xbf16>, vector<32x128xbf16>, vector<8x128xf32> -> vector<8x128xf32>
    %177 = arith.addf %174, %176 : vector<8x128xf32>
    %cst_63 = arith.constant 5.000000e-01 : f32
    %178 = vector.broadcast %cst_63 : f32 to vector<8x128xf32>
    %179 = arith.mulf %178, %177 : vector<8x128xf32>
    %180 = arith.select %12, %177, %179 : vector<8x128xi1>, vector<8x128xf32>
    %181 = math.tanh %180 : vector<8x128xf32>
    %cst_64 = arith.constant 5.000000e-01 : f32
    %182 = vector.broadcast %cst_64 : f32 to vector<8x128xf32>
    %183 = arith.mulf %182, %181 : vector<8x128xf32>
    %cst_65 = arith.constant 5.000000e-01 : f32
    %184 = vector.broadcast %cst_65 : f32 to vector<8x128xf32>
    %185 = arith.addf %183, %184 : vector<8x128xf32>
    %186 = arith.select %12, %181, %185 : vector<8x128xi1>, vector<8x128xf32>
    %187 = vector.extract_strided_slice %186 {offsets = [0, 0], sizes = [8, 32], strides = [1, 1]} : vector<8x128xf32> to vector<8x32xf32>
    %188 = vector.extract_strided_slice %186 {offsets = [0, 32], sizes = [8, 32], strides = [1, 1]} : vector<8x128xf32> to vector<8x32xf32>
    %189 = vector.extract_strided_slice %186 {offsets = [0, 64], sizes = [8, 32], strides = [1, 1]} : vector<8x128xf32> to vector<8x32xf32>
    %190 = vector.extract_strided_slice %186 {offsets = [0, 96], sizes = [8, 32], strides = [1, 1]} : vector<8x128xf32> to vector<8x32xf32>
    %191 = arith.mulf %188, %167 : vector<8x32xf32>
    %192 = arith.mulf %187, %189 : vector<8x32xf32>
    %193 = arith.addf %191, %192 : vector<8x32xf32>
    %194 = math.tanh %193 : vector<8x32xf32>
    %195 = arith.mulf %190, %194 : vector<8x32xf32>
    %196 = arith.truncf %195 : vector<8x32xf32> to vector<8x32xbf16>
    %c7_i32 = arith.constant 7 : i32
    %c8_i32_66 = arith.constant 8 : i32
    %197 = arith.muli %c7_i32, %c8_i32_66 : i32
    %198 = tpu.assume_multiple %197, 8 : i32
    %199 = arith.index_cast %198 : i32 to index
    %c0_67 = arith.constant 0 : index
    %200 = vector.load %arg11[%199, %c0_67] : memref<64x128xf32, #tpu.memory_space<vmem>>, vector<8x128xf32>
    %c0_68 = arith.constant 0 : index
    %c0_69 = arith.constant 0 : index
    %201 = vector.load %arg5[%c0_68, %c0_69] : memref<32x128xbf16, #tpu.memory_space<vmem>>, vector<32x128xbf16>
    %cst_70 = arith.constant dense<0.000000e+00> : vector<8x128xf32>
    %202 = tpu.matmul %196, %201, %cst_70 {dimension_numbers = #tpu.dot_dimension_numbers<[1], [0], [0], [1], [0, 0, 1, 1], [], []>} : vector<8x32xbf16>, vector<32x128xbf16>, vector<8x128xf32> -> vector<8x128xf32>
    %203 = arith.addf %200, %202 : vector<8x128xf32>
    %cst_71 = arith.constant 5.000000e-01 : f32
    %204 = vector.broadcast %cst_71 : f32 to vector<8x128xf32>
    %205 = arith.mulf %204, %203 : vector<8x128xf32>
    %206 = arith.select %12, %203, %205 : vector<8x128xi1>, vector<8x128xf32>
    %207 = math.tanh %206 : vector<8x128xf32>
    %cst_72 = arith.constant 5.000000e-01 : f32
    %208 = vector.broadcast %cst_72 : f32 to vector<8x128xf32>
    %209 = arith.mulf %208, %207 : vector<8x128xf32>
    %cst_73 = arith.constant 5.000000e-01 : f32
    %210 = vector.broadcast %cst_73 : f32 to vector<8x128xf32>
    %211 = arith.addf %209, %210 : vector<8x128xf32>
    %212 = arith.select %12, %207, %211 : vector<8x128xi1>, vector<8x128xf32>
    %213 = vector.extract_strided_slice %212 {offsets = [0, 0], sizes = [8, 32], strides = [1, 1]} : vector<8x128xf32> to vector<8x32xf32>
    %214 = vector.extract_strided_slice %212 {offsets = [0, 32], sizes = [8, 32], strides = [1, 1]} : vector<8x128xf32> to vector<8x32xf32>
    %215 = vector.extract_strided_slice %212 {offsets = [0, 64], sizes = [8, 32], strides = [1, 1]} : vector<8x128xf32> to vector<8x32xf32>
    %216 = vector.extract_strided_slice %212 {offsets = [0, 96], sizes = [8, 32], strides = [1, 1]} : vector<8x128xf32> to vector<8x32xf32>
    %217 = arith.mulf %214, %193 : vector<8x32xf32>
    %218 = arith.mulf %213, %215 : vector<8x32xf32>
    %219 = arith.addf %217, %218 : vector<8x32xf32>
    %220 = math.tanh %219 : vector<8x32xf32>
    %221 = arith.mulf %216, %220 : vector<8x32xf32>
    %222 = arith.truncf %221 : vector<8x32xf32> to vector<8x32xbf16>
    %c8_i32_74 = arith.constant 8 : i32
    %c0_75 = arith.constant 0 : index
    %c0_76 = arith.constant 0 : index
    %223 = vector.load %arg12[%c0_75, %c0_76] : memref<8x32xbf16, #tpu.memory_space<vmem>>, vector<8x32xbf16>
    tpu.vector_store %arg12[%c0_75, %c0_76], %222 {strides = array<i32>} : memref<8x32xbf16, #tpu.memory_space<vmem>>, vector<8x32xbf16>,
    %c0_77 = arith.constant 0 : index
    %c0_78 = arith.constant 0 : index
    %224 = vector.load %arg13[%c0_77, %c0_78] : memref<8x32xf32, #tpu.memory_space<vmem>>, vector<8x32xf32>
    tpu.vector_store %arg13[%c0_77, %c0_78], %219 {strides = array<i32>} : memref<8x32xf32, #tpu.memory_space<vmem>>, vector<8x32xf32>,
    %c1_i32_79 = arith.constant 1 : i32
    %225 = arith.cmpi eq, %arg0, %c1_i32_79 : i32
    %226 = arith.extui %225 : i1 to i32
    %c0_i32_80 = arith.constant 0 : i32
    %227 = arith.cmpi ne, %226, %c0_i32_80 : i32
    scf.if %227 {
      %228 = arith.extf %222 : vector<8x32xbf16> to vector<8x32xf32>
      %c0_81 = arith.constant 0 : index
      %c0_82 = arith.constant 0 : index
      %229 = vector.load %arg9[%c0_81, %c0_82] : memref<8x32xf32, #tpu.memory_space<vmem>>, vector<8x32xf32>
      tpu.vector_store %arg9[%c0_81, %c0_82], %228 {strides = array<i32>} : memref<8x32xf32, #tpu.memory_space<vmem>>, vector<8x32xf32>,
      %c0_83 = arith.constant 0 : index
      %c0_84 = arith.constant 0 : index
      %230 = vector.load %arg10[%c0_83, %c0_84] : memref<8x32xf32, #tpu.memory_space<vmem>>, vector<8x32xf32>
      tpu.vector_store %arg10[%c0_83, %c0_84], %219 {strides = array<i32>} : memref<8x32xf32, #tpu.memory_space<vmem>>, vector<8x32xf32>,
      %c0_85 = arith.constant 0 : index
      %c0_86 = arith.constant 0 : index
      %231 = vector.load %arg6[%c0_85, %c0_86] : memref<32x128xbf16, #tpu.memory_space<vmem>>, vector<32x128xbf16>
      %cst_87 = arith.constant dense<0.000000e+00> : vector<8x128xf32>
      %232 = tpu.matmul %222, %231, %cst_87 {dimension_numbers = #tpu.dot_dimension_numbers<[1], [0], [0], [1], [0, 0, 1, 1], [], []>} : vector<8x32xbf16>, vector<32x128xbf16>, vector<8x128xf32> -> vector<8x128xf32>
      %c0_88 = arith.constant 0 : index
      %c0_89 = arith.constant 0 : index
      %233 = vector.load %arg7[%c0_88, %c0_89] : memref<1x128xf32, #tpu.memory_space<vmem>>, vector<1x128xf32>
      %234 = vector.broadcast %233 : vector<1x128xf32> to vector<8x128xf32>
      %235 = arith.addf %232, %234 : vector<8x128xf32>
      %236 = tpu.iota {dimensions = array<i32: 1>} : vector<8x128xi32>
      %c1_i32_90 = arith.constant 1 : i32
      %237 = vector.broadcast %c1_i32_90 : i32 to vector<8x128xi32>
      %238 = arith.cmpi eq, %236, %237 : vector<8x128xi32>
      %cst_91 = arith.constant 0.000000e+00 : f32
      %239 = vector.broadcast %cst_91 : f32 to vector<8x128xf32>
      %240 = arith.maximumf %235, %239 : vector<8x128xf32>
      %241 = vector.broadcast %cst_91 : f32 to vector<8x128xf32>
      %242 = arith.subf %235, %241 : vector<8x128xf32>
      %243 = arith.cmpf one, %242, %242 : vector<8x128xf32>
      %244 = vector.broadcast %cst_91 : f32 to vector<8x128xf32>
      %245 = arith.addf %235, %244 : vector<8x128xf32>
      %246 = math.absf %242 : vector<8x128xf32>
      %cst_92 = arith.constant 0.000000e+00 : f32
      %247 = vector.broadcast %cst_92 : f32 to vector<8x128xf32>
      %248 = arith.subf %247, %246 : vector<8x128xf32>
      %249 = math.exp %248 : vector<8x128xf32>
      %250 = math.log1p %249 : vector<8x128xf32>
      %251 = arith.addf %240, %250 : vector<8x128xf32>
      %252 = arith.select %243, %245, %251 : vector<8x128xi1>, vector<8x128xf32>
      %253 = arith.select %238, %252, %235 : vector<8x128xi1>, vector<8x128xf32>
      %c0_93 = arith.constant 0 : index
      %c0_94 = arith.constant 0 : index
      %254 = vector.load %arg8[%c0_93, %c0_94] : memref<8x128xf32, #tpu.memory_space<vmem>>, vector<8x128xf32>
      tpu.vector_store %arg8[%c0_93, %c0_94], %253 {strides = array<i32>} : memref<8x128xf32, #tpu.memory_space<vmem>>, vector<8x128xf32>,
    } else {
    }
    return
  }
  func.func @transform_0(%arg0: i32) -> (i32, i32) {
    %c0_i32 = arith.constant 0 : i32
    %c0_i32_0 = arith.constant 0 : i32
    return %arg0, %c0_i32 : i32, i32
  }
  func.func @transform_1(%arg0: i32) -> (i32, i32) {
    %c0_i32 = arith.constant 0 : i32
    %c0_i32_0 = arith.constant 0 : i32
    %c0_i32_1 = arith.constant 0 : i32
    return %c0_i32, %c0_i32_0 : i32, i32
  }
  func.func @transform_2(%arg0: i32) -> (i32, i32) {
    %c0_i32 = arith.constant 0 : i32
    %c0_i32_0 = arith.constant 0 : i32
    %c0_i32_1 = arith.constant 0 : i32
    return %c0_i32, %c0_i32_0 : i32, i32
  }
  func.func @transform_3(%arg0: i32) -> (i32, i32) {
    %c0_i32 = arith.constant 0 : i32
    %c0_i32_0 = arith.constant 0 : i32
    %c0_i32_1 = arith.constant 0 : i32
    return %c0_i32, %c0_i32_0 : i32, i32
  }
  func.func @transform_4(%arg0: i32) -> (i32, i32) {
    %c0_i32 = arith.constant 0 : i32
    %c0_i32_0 = arith.constant 0 : i32
    %c0_i32_1 = arith.constant 0 : i32
    return %c0_i32, %c0_i32_0 : i32, i32
  }
  func.func @transform_5(%arg0: i32) -> (i32, i32) {
    %c0_i32 = arith.constant 0 : i32
    %c0_i32_0 = arith.constant 0 : i32
    %c0_i32_1 = arith.constant 0 : i32
    return %c0_i32, %c0_i32_0 : i32, i32
  }
  func.func @transform_6(%arg0: i32) -> (i32, i32) {
    %c0_i32 = arith.constant 0 : i32
    %c0_i32_0 = arith.constant 0 : i32
    %c0_i32_1 = arith.constant 0 : i32
    return %c0_i32, %c0_i32_0 : i32, i32
  }
  func.func @transform_7(%arg0: i32) -> (i32, i32) {
    %c0_i32 = arith.constant 0 : i32
    %c0_i32_0 = arith.constant 0 : i32
    %c0_i32_1 = arith.constant 0 : i32
    return %c0_i32, %c0_i32_0 : i32, i32
  }
  func.func @transform_8(%arg0: i32) -> (i32, i32) {
    %c0_i32 = arith.constant 0 : i32
    %c0_i32_0 = arith.constant 0 : i32
    %c0_i32_1 = arith.constant 0 : i32
    return %c0_i32, %c0_i32_0 : i32, i32
  }
  func.func @transform_9(%arg0: i32) -> (i32, i32) {
    %c0_i32 = arith.constant 0 : i32
    %c0_i32_0 = arith.constant 0 : i32
    %c0_i32_1 = arith.constant 0 : i32
    return %c0_i32, %c0_i32_0 : i32, i32
  }
}

</mosaic_0001>

<llo_original>
// kernel: vanilla_lstm_forward.1
$region0: #{vanilla_lstm_forward.1}
  #allocation0 [shape = 'u32[]', space=smem, size = 0x4, offset = 0x4, fixed_abs, tag = 'smem constant byte address 0x4 - core index']
  #allocation1 [shape = 'u32[72,128]{1,0:T(1,128)}', space=vmem, size = 0x9000, scoped, tag = 'internal scratch']
  #allocation2 [shape = 'f32[64,128]{1,0:T(8,128)}', space=vmem, size = 0x8000, scoped, tag = 'scratch operand']
  #allocation3 [shape = 'bf16[8,32]{1,0:T(8,128)(2,1)}', space=vmem, size = 0x800, scoped, tag = 'scratch operand']
  #allocation4 [shape = 'f32[8,32]{1,0:T(8,128)}', space=vmem, size = 0x1000, scoped, tag = 'scratch operand']
  %s0 = inlined_call_operand.vmem [shape: bf16[128,5], index: 0, kind: input, shape index: {}]
  %s1 = inlined_call_operand.vmem [shape: f32[8,32], index: 1, kind: input, shape index: {}]
  %s2 = inlined_call_operand.vmem [shape: f32[8,32], index: 2, kind: input, shape index: {}]
  %s3 = inlined_call_operand.vmem [shape: bf16[5,128], index: 3, kind: input, shape index: {}]
  %s4 = inlined_call_operand.vmem [shape: bf16[32,128], index: 4, kind: input, shape index: {}]
  %s5 = inlined_call_operand.vmem [shape: bf16[32,128], index: 5, kind: input, shape index: {}]
  %s6 = inlined_call_operand.vmem [shape: f32[1,128], index: 6, kind: input, shape index: {}]
  %s7 = inlined_call_operand.vmem [shape: f32[8,128], index: 7, kind: output, shape index: {0}]
  %s8 = inlined_call_operand.hbm [shape: f32[8,32], index: 8, kind: output, shape index: {1}]
  %s9 = inlined_call_operand.hbm [shape: f32[8,32], index: 9, kind: output, shape index: {2}]
  %10 = xla_tuple %s7, %s8, %s9
  %s11 = sld [smem:[#allocation0]]
  $region85: #{vanilla_lstm_forward.1} parent=0
    _
  %s13 = ssub.s32 1, %s11
  %s14 = scalar_select 0, %s13, %s11
  $region1: #{vanilla_lstm_forward.1} parent=0
    #allocation5 [shape = 'u8[4096]{0}', space=vmem, size = 0x1000, scoped, tag = 'output window, operand 1, single buffered']
    #allocation6 [shape = 's32[2]{0}', space=sflag, size = 0x8, scoped, tag = 'scoped memory for vanilla_lstm_forward.1']
    #allocation7 [shape = 'u8[4096]{0}', space=vmem, size = 0x1000, scoped, tag = 'output window, operand 2, single buffered']
    #allocation8 [shape = 's32[1]{0}', space=sflag, size = 0x4, scoped, tag = 'scoped memory for vanilla_lstm_forward.1']
    %15 = vsyncpa [#allocation6], 0
    %16 = vsyncpa [#allocation8], 0
    loop: start=0, step=1, limit=4
    $region2: #{vanilla_lstm_forward.1} parent=1 // loop_pre_header
      _
    $region3: #{vanilla_lstm_forward.1} parent=1 // loop_header
      %s18 = sphi 0, %s22
      %p19 = scmp.ge.s32.totalorder %s18, 4
      %s28 = sphi 0, %s30
      %s31 = sphi 0, %s28
      %s32 = sphi 0, %s31
      %s48 = sphi 0, %s32
      %s52 = sphi 0, %s52
      %s54 = sphi 0, %s52
      %s55 = sphi 0, %s54
      %s69 = sphi 0, %s55
      %s73 = sphi 0, %s73
      %s75 = sphi 0, %s73
      %s76 = sphi 0, %s75
      %s90 = sphi 0, %s76
      %s94 = sphi 0, %s94
      %s96 = sphi 0, %s94
      %s97 = sphi 0, %s96
      %s111 = sphi 0, %s97
      %s115 = sphi 0, %s115
      %s117 = sphi 0, %s115
      %s118 = sphi 0, %s117
      %s132 = sphi 0, %s118
      %s136 = sphi 0, %s136
      %s138 = sphi 0, %s136
      %s139 = sphi 0, %s138
      %s153 = sphi 0, %s139
      %s157 = sphi 0, %s157
      %s159 = sphi 0, %s157
      %s160 = sphi 0, %s159
      %s174 = sphi 0, %s160
      %s178 = sphi 0, %s178
      %s180 = sphi 0, %s178
      %s181 = sphi 0, %s180
      %s195 = sphi 0, %s181
      %s199 = sphi 0, %s199
      %s201 = sphi 0, %s199
      %s202 = sphi 0, %s201
      %s216 = sphi 0, %s202
      %s220 = sphi 0, %s220
      %s222 = sphi 0, %s220
      %s223 = sphi 0, %s222
      %s237 = sphi 0, %s223
    $region4: #{vanilla_lstm_forward.1} parent=1 // loop_header_branch
      %21 = sbr.rel (%p19) target = $region8
    $region5: #{vanilla_lstm_forward.1} parent=1 // loop_body
      %s23 = ssub.s32 %s18, 1
      %s24 = ssub.s32 %s18, 2
      %s25 = sadd.s32 %s18, 1
      %s26 = ssub.s32 %s18, %s25
      %p27 = scmp.eq.s32.totalorder %s26, 0
      %s29 = sadd.s32 %s28, 1
      %s30 = scalar_select %p27, %s28, %s29
      %p33 = pneg %p27
      %p34 = scmp.eq.s32.totalorder %s18, 1
      %p35 = por %p33, %p34
      %p36 = scmp.ne.s32.totalorder %s28, %s31
      %p37 = scmp.eq.s32.totalorder %s18, 0
      %p38 = por %p36, %p37
      %p39 = scmp.ne.s32.totalorder %s28, %s31
      %p40 = scmp.eq.s32.totalorder %s23, 1
      %p41 = por %p39, %p40
      %p42 = scmp.ne.s32.totalorder %s31, %s32
      %p43 = scmp.eq.s32.totalorder %s23, 0
      %p44 = por %p42, %p43
      %p45 = scmp.ne.s32.totalorder %s31, %s32
      %p46 = scmp.eq.s32.totalorder %s24, 1
      %p47 = por %p45, %p46
      %p49 = scmp.ne.s32.totalorder %s32, %s48
      %p50 = scmp.eq.s32.totalorder %s24, 0
      %p51 = por %p49, %p50
      %s53 = sadd.s32 %s52, 1
      %p56 = scmp.eq.s32.totalorder %s18, 1
      %p57 = scmp.ne.s32.totalorder %s52, %s54
      %p58 = scmp.eq.s32.totalorder %s18, 0
      %p59 = por %p57, %p58
      %p60 = scmp.ne.s32.totalorder %s52, %s54
      %p61 = scmp.eq.s32.totalorder %s23, 1
      %p62 = por %p60, %p61
      %p63 = scmp.ne.s32.totalorder %s54, %s55
      %p64 = scmp.eq.s32.totalorder %s23, 0
      %p65 = por %p63, %p64
      %p66 = scmp.ne.s32.totalorder %s54, %s55
      %p67 = scmp.eq.s32.totalorder %s24, 1
      %p68 = por %p66, %p67
      %p70 = scmp.ne.s32.totalorder %s55, %s69
      %p71 = scmp.eq.s32.totalorder %s24, 0
      %p72 = por %p70, %p71
      %s74 = sadd.s32 %s73, 1
      %p77 = scmp.eq.s32.totalorder %s18, 1
      %p78 = scmp.ne.s32.totalorder %s73, %s75
      %p79 = scmp.eq.s32.totalorder %s18, 0
      %p80 = por %p78, %p79
      %p81 = scmp.ne.s32.totalorder %s73, %s75
      %p82 = scmp.eq.s32.totalorder %s23, 1
      %p83 = por %p81, %p82
      %p84 = scmp.ne.s32.totalorder %s75, %s76
      %p85 = scmp.eq.s32.totalorder %s23, 0
      %p86 = por %p84, %p85
      %p87 = scmp.ne.s32.totalorder %s75, %s76
      %p88 = scmp.eq.s32.totalorder %s24, 1
      %p89 = por %p87, %p88
      %p91 = scmp.ne.s32.totalorder %s76, %s90
      %p92 = scmp.eq.s32.totalorder %s24, 0
      %p93 = por %p91, %p92
      %s95 = sadd.s32 %s94, 1
      %p98 = scmp.eq.s32.totalorder %s18, 1
      %p99 = scmp.ne.s32.totalorder %s94, %s96
      %p100 = scmp.eq.s32.totalorder %s18, 0
      %p101 = por %p99, %p100
      %p102 = scmp.ne.s32.totalorder %s94, %s96
      %p103 = scmp.eq.s32.totalorder %s23, 1
      %p104 = por %p102, %p103
      %p105 = scmp.ne.s32.totalorder %s96, %s97
      %p106 = scmp.eq.s32.totalorder %s23, 0
      %p107 = por %p105, %p106
      %p108 = scmp.ne.s32.totalorder %s96, %s97
      %p109 = scmp.eq.s32.totalorder %s24, 1
      %p110 = por %p108, %p109
      %p112 = scmp.ne.s32.totalorder %s97, %s111
      %p113 = scmp.eq.s32.totalorder %s24, 0
      %p114 = por %p112, %p113
      %s116 = sadd.s32 %s115, 1
      %p119 = scmp.eq.s32.totalorder %s18, 1
      %p120 = scmp.ne.s32.totalorder %s115, %s117
      %p121 = scmp.eq.s32.totalorder %s18, 0
      %p122 = por %p120, %p121
      %p123 = scmp.ne.s32.totalorder %s115, %s117
      %p124 = scmp.eq.s32.totalorder %s23, 1
      %p125 = por %p123, %p124
      %p126 = scmp.ne.s32.totalorder %s117, %s118
      %p127 = scmp.eq.s32.totalorder %s23, 0
      %p128 = por %p126, %p127
      %p129 = scmp.ne.s32.totalorder %s117, %s118
      %p130 = scmp.eq.s32.totalorder %s24, 1
      %p131 = por %p129, %p130
      %p133 = scmp.ne.s32.totalorder %s118, %s132
      %p134 = scmp.eq.s32.totalorder %s24, 0
      %p135 = por %p133, %p134
      %s137 = sadd.s32 %s136, 1
      %p140 = scmp.eq.s32.totalorder %s18, 1
      %p141 = scmp.ne.s32.totalorder %s136, %s138
      %p142 = scmp.eq.s32.totalorder %s18, 0
      %p143 = por %p141, %p142
      %p144 = scmp.ne.s32.totalorder %s136, %s138
      %p145 = scmp.eq.s32.totalorder %s23, 1
      %p146 = por %p144, %p145
      %p147 = scmp.ne.s32.totalorder %s138, %s139
      %p148 = scmp.eq.s32.totalorder %s23, 0
      %p149 = por %p147, %p148
      %p150 = scmp.ne.s32.totalorder %s138, %s139
      %p151 = scmp.eq.s32.totalorder %s24, 1
      %p152 = por %p150, %p151
      %p154 = scmp.ne.s32.totalorder %s139, %s153
      %p155 = scmp.eq.s32.totalorder %s24, 0
      %p156 = por %p154, %p155
      %s158 = sadd.s32 %s157, 1
      %p161 = scmp.eq.s32.totalorder %s18, 1
      %p162 = scmp.ne.s32.totalorder %s157, %s159
      %p163 = scmp.eq.s32.totalorder %s18, 0
      %p164 = por %p162, %p163
      %p165 = scmp.ne.s32.totalorder %s157, %s159
      %p166 = scmp.eq.s32.totalorder %s23, 1
      %p167 = por %p165, %p166
      %p168 = scmp.ne.s32.totalorder %s159, %s160
      %p169 = scmp.eq.s32.totalorder %s23, 0
      %p170 = por %p168, %p169
      %p171 = scmp.ne.s32.totalorder %s159, %s160
      %p172 = scmp.eq.s32.totalorder %s24, 1
      %p173 = por %p171, %p172
      %p175 = scmp.ne.s32.totalorder %s160, %s174
      %p176 = scmp.eq.s32.totalorder %s24, 0
      %p177 = por %p175, %p176
      %s179 = sadd.s32 %s178, 1
      %p182 = scmp.eq.s32.totalorder %s18, 1
      %p183 = scmp.ne.s32.totalorder %s178, %s180
      %p184 = scmp.eq.s32.totalorder %s18, 0
      %p185 = por %p183, %p184
      %p186 = scmp.ne.s32.totalorder %s178, %s180
      %p187 = scmp.eq.s32.totalorder %s23, 1
      %p188 = por %p186, %p187
      %p189 = scmp.ne.s32.totalorder %s180, %s181
      %p190 = scmp.eq.s32.totalorder %s23, 0
      %p191 = por %p189, %p190
      %p192 = scmp.ne.s32.totalorder %s180, %s181
      %p193 = scmp.eq.s32.totalorder %s24, 1
      %p194 = por %p192, %p193
      %p196 = scmp.ne.s32.totalorder %s181, %s195
      %p197 = scmp.eq.s32.totalorder %s24, 0
      %p198 = por %p196, %p197
      %s200 = sadd.s32 %s199, 1
      %p203 = scmp.eq.s32.totalorder %s18, 1
      %p204 = scmp.ne.s32.totalorder %s199, %s201
      %p205 = scmp.eq.s32.totalorder %s18, 0
      %p206 = por %p204, %p205
      %p207 = scmp.ne.s32.totalorder %s199, %s201
      %p208 = scmp.eq.s32.totalorder %s23, 1
      %p209 = por %p207, %p208
      %p210 = scmp.ne.s32.totalorder %s201, %s202
      %p211 = scmp.eq.s32.totalorder %s23, 0
      %p212 = por %p210, %p211
      %p213 = scmp.ne.s32.totalorder %s201, %s202
      %p214 = scmp.eq.s32.totalorder %s24, 1
      %p215 = por %p213, %p214
      %p217 = scmp.ne.s32.totalorder %s202, %s216
      %p218 = scmp.eq.s32.totalorder %s24, 0
      %p219 = por %p217, %p218
      %s221 = sadd.s32 %s220, 1
      %p224 = scmp.eq.s32.totalorder %s18, 1
      %p225 = scmp.ne.s32.totalorder %s220, %s222
      %p226 = scmp.eq.s32.totalorder %s18, 0
      %p227 = por %p225, %p226
      %p228 = scmp.ne.s32.totalorder %s220, %s222
      %p229 = scmp.eq.s32.totalorder %s23, 1
      %p230 = por %p228, %p229
      %p231 = scmp.ne.s32.totalorder %s222, %s223
      %p232 = scmp.eq.s32.totalorder %s23, 0
      %p233 = por %p231, %p232
      %p234 = scmp.ne.s32.totalorder %s222, %s223
      %p235 = scmp.eq.s32.totalorder %s24, 1
      %p236 = por %p234, %p235
      %p238 = scmp.ne.s32.totalorder %s223, %s237
      %p239 = scmp.eq.s32.totalorder %s24, 0
      %p240 = por %p238, %p239
      %p241 = scmp.le.s32.totalorder 1, %s18
      %p242 = scmp.lt.s32.totalorder %s18, 3
      %p243 = pnand %p241, %p242
      %p244 = pneg %p243
      // Predicated region
      $region9: #{vanilla_lstm_forward.1} parent=5 // pred_check
        _
      $region10: #{vanilla_lstm_forward.1} parent=5 // pred_check_branch
        %246 = sbr.rel (%p243) target = $region12
      $region11: #{vanilla_lstm_forward.1} parent=5 // pred_region
        %s247 = ssub.s32 %s18, 1
        // Predicated region
        $region13: #{vanilla_lstm_forward.1} parent=11 // pred_check
          %p248 = pneg %p65
        $region14: #{vanilla_lstm_forward.1} parent=11 // pred_check_branch
          %250 = sbr.rel (%p248) target = $region16
        $region15: #{vanilla_lstm_forward.1} parent=11 // pred_region
          _
        $region16: #{vanilla_lstm_forward.1} parent=11 // pred_fallthru
          _
        // Predicated region
        $region17: #{vanilla_lstm_forward.1} parent=11 // pred_check
          %p251 = pneg %p86
        $region18: #{vanilla_lstm_forward.1} parent=11 // pred_check_branch
          %253 = sbr.rel (%p251) target = $region20
        $region19: #{vanilla_lstm_forward.1} parent=11 // pred_region
          _
        $region20: #{vanilla_lstm_forward.1} parent=11 // pred_fallthru
          _
        // Predicated region
        $region21: #{vanilla_lstm_forward.1} parent=11 // pred_check
          %p254 = pneg %p107
        $region22: #{vanilla_lstm_forward.1} parent=11 // pred_check_branch
          %256 = sbr.rel (%p254) target = $region24
        $region23: #{vanilla_lstm_forward.1} parent=11 // pred_region
          _
        $region24: #{vanilla_lstm_forward.1} parent=11 // pred_fallthru
          _
        // Predicated region
        $region25: #{vanilla_lstm_forward.1} parent=11 // pred_check
          %p257 = pneg %p128
        $region26: #{vanilla_lstm_forward.1} parent=11 // pred_check_branch
          %259 = sbr.rel (%p257) target = $region28
        $region27: #{vanilla_lstm_forward.1} parent=11 // pred_region
          _
        $region28: #{vanilla_lstm_forward.1} parent=11 // pred_fallthru
          _
        // Predicated region
        $region29: #{vanilla_lstm_forward.1} parent=11 // pred_check
          %p260 = pneg %p149
        $region30: #{vanilla_lstm_forward.1} parent=11 // pred_check_branch
          %262 = sbr.rel (%p260) target = $region32
        $region31: #{vanilla_lstm_forward.1} parent=11 // pred_region
          _
        $region32: #{vanilla_lstm_forward.1} parent=11 // pred_fallthru
          _
        // Predicated region
        $region33: #{vanilla_lstm_forward.1} parent=11 // pred_check
          %p263 = pneg %p170
        $region34: #{vanilla_lstm_forward.1} parent=11 // pred_check_branch
          %265 = sbr.rel (%p263) target = $region36
        $region35: #{vanilla_lstm_forward.1} parent=11 // pred_region
          _
        $region36: #{vanilla_lstm_forward.1} parent=11 // pred_fallthru
          _
      $region12: #{vanilla_lstm_forward.1} parent=5 // pred_fallthru
        _
      %p266 = scmp.lt.s32.totalorder %s18, 2
      // Predicated region
      $region37: #{vanilla_lstm_forward.1} parent=5 // pred_check
        %p267 = pneg %p266
      $region38: #{vanilla_lstm_forward.1} parent=5 // pred_check_branch
        %269 = sbr.rel (%p267) target = $region40
      $region39: #{vanilla_lstm_forward.1} parent=5 // pred_region
        // Predicated region
        $region41: #{vanilla_lstm_forward.1} parent=39 // pred_check
          %p270 = pneg %p38
        $region42: #{vanilla_lstm_forward.1} parent=39 // pred_check_branch
          %272 = sbr.rel (%p270) target = $region44
        $region43: #{vanilla_lstm_forward.1} parent=39 // pred_region
          %s273 = smul.u32 8, %s18
          %p274 = scmp.lt.s32.totalorder %s273, 15
          %s275 = scalar_select %p274, %s273, 15
          %s276 = smul.addr %s275, 4
          %s277 = scalar_lea.vmem %s0, %s276
          %s278 = smul.u32 8, %s18
        $region44: #{vanilla_lstm_forward.1} parent=39 // pred_fallthru
          _
      $region40: #{vanilla_lstm_forward.1} parent=5 // pred_fallthru
        _
      %p279 = scmp.le.s32.totalorder 1, %s18
      %p280 = scmp.lt.s32.totalorder %s18, 3
      %p281 = pnand %p279, %p280
      %p282 = pneg %p281
      // Predicated region
      $region45: #{vanilla_lstm_forward.1} parent=5 // pred_check
        _
      $region46: #{vanilla_lstm_forward.1} parent=5 // pred_check_branch
        %284 = sbr.rel (%p281) target = $region48
      $region47: #{vanilla_lstm_forward.1} parent=5 // pred_region
        %s285 = ssub.s32 %s18, 1
        %s286 = smul.u32 8, %s23
        %p287 = scmp.lt.s32.totalorder %s286, 15
        %s288 = scalar_select %p287, %s286, 15
        %s289 = smul.addr %s288, 4
        %s290 = scalar_lea.vmem %s0, %s289
        %p291 = pneg %p44
        %p292 = pneg %p41
        %p293 = pneg %p65
        %p294 = pneg %p62
        %p295 = pneg %p86
        %p296 = pneg %p83
        %p297 = pneg %p107
        %p298 = pneg %p104
        %p299 = pneg %p128
        %p300 = pneg %p125
        %p301 = pneg %p149
        %p302 = pneg %p146
        %p303 = pneg %p170
        %p304 = pneg %p167
        %p305 = pneg %p191
        %p306 = pneg %p188
        %p307 = pneg %p212
        %p308 = pneg %p209
        %p309 = pneg %p233
        %p310 = pneg %p230
        %s311 = smul.u32 8, %s23
        %p312 = scmp.lt.s32.totalorder %s311, 15
        %s313 = scalar_select %p312, %s311, 15
        %s314 = smul.addr %s313, 4
        %s315 = scalar_lea.vmem %s0, %s314
        %s316 = smul.u32 8, %s23
        %p318 = scmp.eq.s32.totalorder %s23, 0
        // Predicated region
        $region49: #{vanilla_lstm_forward.1} parent=47 // pred_check
          %p319 = pneg %p318
        $region50: #{vanilla_lstm_forward.1} parent=47 // pred_check_branch
          %321 = sbr.rel (%p319) target = $region52
        $region51: #{vanilla_lstm_forward.1} parent=47 // pred_region
          %v322 = vld [vmem:[%s1] sm:$0xff]
          %v323 = vpack.c.bf16 %v322, %v322
          %vm324 = vcmask 257024
          %325 = vst.msk [vmem:[#allocation3] sm:$0xf] %vm324, %v323
          %v326 = vld [vmem:[%s2] sm:$0xff]
          %vm327 = vcmask 261120
          %328 = vst.msk [vmem:[#allocation4] sm:$0xff] %vm327, %v326
        $region52: #{vanilla_lstm_forward.1} parent=47 // pred_fallthru
          _
        %v329 = vld [vmem:[%s315] sm:$0xf]
        %v330 = vld [vmem:[%s315 + $0x4] sm:$0xf]
        %v331 = vld [vmem:[%s315 + $0x8] sm:$0xf]
        %v332 = vld [vmem:[%s315 + $0xc] sm:$0xf]
        %v333 = vld [vmem:[%s315 + $0x10] sm:$0xf]
        %v334 = vld [vmem:[%s315 + $0x14] sm:$0xf]
        %v335 = vld [vmem:[%s315 + $0x18] sm:$0xf]
        %v336 = vld [vmem:[%s315 + $0x1c] sm:$0xf]
        %v337 = vld [vmem:[%s3] sm:$0x7]
        %v346 = vunpack.c.l.b16 %v329
        %v347 = vunpack.c.l.b16 %v330
        %v348 = vunpack.c.l.b16 %v331
        %v349 = vunpack.c.l.b16 %v332
        %v350 = vunpack.c.l.b16 %v333
        %v351 = vunpack.c.l.b16 %v334
        %v352 = vunpack.c.l.b16 %v335
        %v353 = vunpack.c.l.b16 %v336
        %v354 = vpack.c.b16 %v347, %v346
        %v355 = vpack.c.b16 %v349, %v348
        %v356 = vpack.c.b16 %v351, %v350
        %v357 = vpack.c.b16 %v353, %v352
        %vm358 = vcmask 39936
        %v360 = vsel %vm358, %v354, 0
        %v363 = vsel %vm358, %v355, 0
        %v366 = vsel %vm358, %v356, 0
        %v369 = vsel %vm358, %v357, 0
        %vm371 = vcmask 1041408
        %vm372 = vcmask 1042432
        %v373 = vsel %vm371, 4294967295, 65535
        %v374 = vsel %vm372, %v373, 0
        %v376 = vand.u32 %v337, %v374
        %378 = vmatpush.bf16.msra.mxu0 0
        %379 = vmatpush.bf16.msra.mxu0 0
        %380 = vmatpush.bf16.msra.mxu0 0
        %381 = vmatpush.bf16.msra.mxu0 0
        %382 = vmatpush.bf16.msra.mxu0 0
        %383 = vmatpush.bf16.msra.mxu0 0
        %384 = vmatpush.bf16.msra.mxu0 0
        %385 = vmatpush.bf16.msra.mxu0 %v376
        %386 = vmatmul.bf16.gmra.mxu0 %v360
        %v387 = vpop.f32.mrf.mxu0
        %v388 = vadd.f32 0.0, %v387
        %v389 = vpop.f32.mrf.mxu0
        %v390 = vadd.f32 0.0, %v389
        %391 = vmatmul.bf16.gmra.mxu0 %v363
        %v392 = vpop.f32.mrf.mxu0
        %v393 = vadd.f32 0.0, %v392
        %v394 = vpop.f32.mrf.mxu0
        %v395 = vadd.f32 0.0, %v394
        %396 = vmatmul.bf16.gmra.mxu0 %v366
        %v397 = vpop.f32.mrf.mxu0
        %v398 = vadd.f32 0.0, %v397
        %v399 = vpop.f32.mrf.mxu0
        %v400 = vadd.f32 0.0, %v399
        %401 = vmatmul.bf16.gmra.mxu0 %v369
        %v402 = vpop.f32.mrf.mxu0
        %v403 = vadd.f32 0.0, %v402
        %v404 = vpop.f32.mrf.mxu0
        %v405 = vadd.f32 0.0, %v404
        %406 = vdwg.mxu0
        %407 = vst [vmem:[#allocation2] sm:$0xff] %v388
        %408 = vst [vmem:[#allocation2 + $0x8] sm:$0xff] %v390
        %409 = vst [vmem:[#allocation2 + $0x10] sm:$0xff] %v393
        %410 = vst [vmem:[#allocation2 + $0x18] sm:$0xff] %v395
        %411 = vst [vmem:[#allocation2 + $0x20] sm:$0xff] %v398
        %412 = vst [vmem:[#allocation2 + $0x28] sm:$0xff] %v400
        %413 = vst [vmem:[#allocation2 + $0x30] sm:$0xff] %v403
        %414 = vst [vmem:[#allocation2 + $0x38] sm:$0xff] %v405
        %v415 = vlaneseq
        %v416 = vand.u32 %v415, 127
        %vm417 = vcmp.ge.s32.totalorder %v416, 64
        %vm418 = vcmp.lt.s32.totalorder %v416, 96
        %vm419 = vmand %vm417, %vm418
        %v420 = vld [vmem:[#allocation3] sm:$0xf]
        %v421 = vld [vmem:[#allocation4] sm:$0xff]
        %v422 = vld [vmem:[#allocation2] sm:$0xff]
        %v423 = vld [vmem:[%s4] sm:$0xf]
        %v424 = vld [vmem:[%s4 + $0x4] sm:$0xf]
        %v425 = vld [vmem:[%s4 + $0x8] sm:$0xf]
        %v426 = vld [vmem:[%s4 + $0xc] sm:$0xf]
        %v431 = vunpack.c.l.b16 %v423
        %v432 = vunpack.c.l.b16 %v424
        %v433 = vunpack.c.l.b16 %v425
        %v434 = vunpack.c.l.b16 %v426
        %v435 = vpack.c.b16 %v432, %v431
        %v436 = vpack.c.b16 %v434, %v433
        %vm439 = vcmask 261120
        %v441 = vsel %vm439, %v420, 0
        %443 = vmatpush.bf16.msra.mxu0 0
        %444 = vmatpush.bf16.msra.mxu0 0
        %445 = vmatpush.bf16.msra.mxu0 0
        %446 = vmatpush.bf16.msra.mxu0 0
        %447 = vmatpush.bf16.msra.mxu0 0
        %448 = vmatpush.bf16.msra.mxu0 0
        %449 = vmatpush.bf16.msra.mxu0 %v436
        %450 = vmatpush.bf16.msra.mxu0 %v435
        %451 = vmatmul.bf16.gmra.mxu0 %v441
        %v452 = vpop.f32.mrf.mxu0
        %v453 = vadd.f32 0.0, %v452
        %v454 = vpop.f32.mrf.mxu0
        %455 = vdwg.mxu0
        %v456 = vadd.f32 %v422, %v453
        %v457 = vmul.f32 %v456, 0.5
        %v458 = vsel %vm419, %v456, %v457
        %v459 = vtanh.pop %v458
        %v460 = vmul.f32 %v459, 0.5
        %v461 = vadd.f32 %v460, 0.5
        %v462 = vsel %vm419, %v459, %v461
        %464 = vrot.lane.b32.xlu0 %v421, 32
        %v465 = vpop.permute.xlu0 %464
        %v467 = vmul.f32 %v462, %v465
        %469 = vrot.lane.b32.xlu0 %v462, 64
        %v470 = vpop.permute.xlu0 %469
        %v472 = vmul.f32 %v462, %v470
        %474 = vrot.lane.b32.xlu0 %v472, 32
        %v475 = vpop.permute.xlu0 %474
        %v477 = vadd.f32 %v467, %v475
        %v478 = vtanh.pop %v477
        %480 = vrot.lane.b32.xlu0 %v478, 64
        %v481 = vpop.permute.xlu0 %480
        %v483 = vmul.f32 %v462, %v481
        %v484 = vpack.c.bf16 %v483, %v483
        %s485 = scalar_lea.vmem [#allocation2], 8
        %v486 = vld [vmem:[%s485] sm:$0xff]
        %488 = vrot.lane.b32.xlu0 %v484, 32
        %v489 = vpop.permute.xlu0 %488
        %v491 = vsel %vm439, %v489, 0
        %493 = vmatpush.bf16.msra.mxu0 0
        %494 = vmatpush.bf16.msra.mxu0 0
        %495 = vmatpush.bf16.msra.mxu0 0
        %496 = vmatpush.bf16.msra.mxu0 0
        %497 = vmatpush.bf16.msra.mxu0 0
        %498 = vmatpush.bf16.msra.mxu0 0
        %499 = vmatpush.bf16.msra.mxu0 %v436
        %500 = vmatpush.bf16.msra.mxu0 %v435
        %501 = vmatmul.bf16.gmra.mxu0 %v491
        %v502 = vpop.f32.mrf.mxu0
        %v503 = vadd.f32 0.0, %v502
        %v504 = vpop.f32.mrf.mxu0
        %505 = vdwg.mxu0
        %v506 = vadd.f32 %v486, %v503
        %v507 = vmul.f32 %v506, 0.5
        %v508 = vsel %vm419, %v506, %v507
        %v509 = vtanh.pop %v508
        %v510 = vmul.f32 %v509, 0.5
        %v511 = vadd.f32 %v510, 0.5
        %v512 = vsel %vm419, %v509, %v511
        %v513 = vmul.f32 %v512, %v477
        %515 = vrot.lane.b32.xlu0 %v512, 64
        %v516 = vpop.permute.xlu0 %515
        %v518 = vmul.f32 %v512, %v516
        %520 = vrot.lane.b32.xlu0 %v518, 32
        %v521 = vpop.permute.xlu0 %520
        %v523 = vadd.f32 %v513, %v521
        %v524 = vtanh.pop %v523
        %526 = vrot.lane.b32.xlu0 %v524, 64
        %v527 = vpop.permute.xlu0 %526
        %v529 = vmul.f32 %v512, %v527
        %v530 = vpack.c.bf16 %v529, %v529
        %s531 = scalar_lea.vmem [#allocation2], 16
        %v532 = vld [vmem:[%s531] sm:$0xff]
        %534 = vrot.lane.b32.xlu0 %v530, 32
        %v535 = vpop.permute.xlu0 %534
        %v537 = vsel %vm439, %v535, 0
        %539 = vmatpush.bf16.msra.mxu0 0
        %540 = vmatpush.bf16.msra.mxu0 0
        %541 = vmatpush.bf16.msra.mxu0 0
        %542 = vmatpush.bf16.msra.mxu0 0
        %543 = vmatpush.bf16.msra.mxu0 0
        %544 = vmatpush.bf16.msra.mxu0 0
        %545 = vmatpush.bf16.msra.mxu0 %v436
        %546 = vmatpush.bf16.msra.mxu0 %v435
        %547 = vmatmul.bf16.gmra.mxu0 %v537
        %v548 = vpop.f32.mrf.mxu0
        %v549 = vadd.f32 0.0, %v548
        %v550 = vpop.f32.mrf.mxu0
        %551 = vdwg.mxu0
        %v552 = vadd.f32 %v532, %v549
        %v553 = vmul.f32 %v552, 0.5
        %v554 = vsel %vm419, %v552, %v553
        %v555 = vtanh.pop %v554
        %v556 = vmul.f32 %v555, 0.5
        %v557 = vadd.f32 %v556, 0.5
        %v558 = vsel %vm419, %v555, %v557
        %v559 = vmul.f32 %v558, %v523
        %561 = vrot.lane.b32.xlu0 %v558, 64
        %v562 = vpop.permute.xlu0 %561
        %v564 = vmul.f32 %v558, %v562
        %566 = vrot.lane.b32.xlu0 %v564, 32
        %v567 = vpop.permute.xlu0 %566
        %v569 = vadd.f32 %v559, %v567
        %v570 = vtanh.pop %v569
        %572 = vrot.lane.b32.xlu0 %v570, 64
        %v573 = vpop.permute.xlu0 %572
        %v575 = vmul.f32 %v558, %v573
        %v576 = vpack.c.bf16 %v575, %v575
        %s577 = scalar_lea.vmem [#allocation2], 24
        %v578 = vld [vmem:[%s577] sm:$0xff]
        %580 = vrot.lane.b32.xlu0 %v576, 32
        %v581 = vpop.permute.xlu0 %580
        %v583 = vsel %vm439, %v581, 0
        %585 = vmatpush.bf16.msra.mxu0 0
        %586 = vmatpush.bf16.msra.mxu0 0
        %587 = vmatpush.bf16.msra.mxu0 0
        %588 = vmatpush.bf16.msra.mxu0 0
        %589 = vmatpush.bf16.msra.mxu0 0
        %590 = vmatpush.bf16.msra.mxu0 0
        %591 = vmatpush.bf16.msra.mxu0 %v436
        %592 = vmatpush.bf16.msra.mxu0 %v435
        %593 = vmatmul.bf16.gmra.mxu0 %v583
        %v594 = vpop.f32.mrf.mxu0
        %v595 = vadd.f32 0.0, %v594
        %v596 = vpop.f32.mrf.mxu0
        %597 = vdwg.mxu0
        %v598 = vadd.f32 %v578, %v595
        %v599 = vmul.f32 %v598, 0.5
        %v600 = vsel %vm419, %v598, %v599
        %v601 = vtanh.pop %v600
        %v602 = vmul.f32 %v601, 0.5
        %v603 = vadd.f32 %v602, 0.5
        %v604 = vsel %vm419, %v601, %v603
        %v605 = vmul.f32 %v604, %v569
        %607 = vrot.lane.b32.xlu0 %v604, 64
        %v608 = vpop.permute.xlu0 %607
        %v610 = vmul.f32 %v604, %v608
        %612 = vrot.lane.b32.xlu0 %v610, 32
        %v613 = vpop.permute.xlu0 %612
        %v615 = vadd.f32 %v605, %v613
        %v616 = vtanh.pop %v615
        %618 = vrot.lane.b32.xlu0 %v616, 64
        %v619 = vpop.permute.xlu0 %618
        %v621 = vmul.f32 %v604, %v619
        %v622 = vpack.c.bf16 %v621, %v621
        %s623 = scalar_lea.vmem [#allocation2], 32
        %v624 = vld [vmem:[%s623] sm:$0xff]
        %626 = vrot.lane.b32.xlu0 %v622, 32
        %v627 = vpop.permute.xlu0 %626
        %v629 = vsel %vm439, %v627, 0
        %631 = vmatpush.bf16.msra.mxu0 0
        %632 = vmatpush.bf16.msra.mxu0 0
        %633 = vmatpush.bf16.msra.mxu0 0
        %634 = vmatpush.bf16.msra.mxu0 0
        %635 = vmatpush.bf16.msra.mxu0 0
        %636 = vmatpush.bf16.msra.mxu0 0
        %637 = vmatpush.bf16.msra.mxu0 %v436
        %638 = vmatpush.bf16.msra.mxu0 %v435
        %639 = vmatmul.bf16.gmra.mxu0 %v629
        %v640 = vpop.f32.mrf.mxu0
        %v641 = vadd.f32 0.0, %v640
        %v642 = vpop.f32.mrf.mxu0
        %643 = vdwg.mxu0
        %v644 = vadd.f32 %v624, %v641
        %v645 = vmul.f32 %v644, 0.5
        %v646 = vsel %vm419, %v644, %v645
        %v647 = vtanh.pop %v646
        %v648 = vmul.f32 %v647, 0.5
        %v649 = vadd.f32 %v648, 0.5
        %v650 = vsel %vm419, %v647, %v649
        %v651 = vmul.f32 %v650, %v615
        %653 = vrot.lane.b32.xlu0 %v650, 64
        %v654 = vpop.permute.xlu0 %653
        %v656 = vmul.f32 %v650, %v654
        %658 = vrot.lane.b32.xlu0 %v656, 32
        %v659 = vpop.permute.xlu0 %658
        %v661 = vadd.f32 %v651, %v659
        %v662 = vtanh.pop %v661
        %664 = vrot.lane.b32.xlu0 %v662, 64
        %v665 = vpop.permute.xlu0 %664
        %v667 = vmul.f32 %v650, %v665
        %v668 = vpack.c.bf16 %v667, %v667
        %s669 = scalar_lea.vmem [#allocation2], 40
        %v670 = vld [vmem:[%s669] sm:$0xff]
        %672 = vrot.lane.b32.xlu0 %v668, 32
        %v673 = vpop.permute.xlu0 %672
        %v675 = vsel %vm439, %v673, 0
        %677 = vmatpush.bf16.msra.mxu0 0
        %678 = vmatpush.bf16.msra.mxu0 0
        %679 = vmatpush.bf16.msra.mxu0 0
        %680 = vmatpush.bf16.msra.mxu0 0
        %681 = vmatpush.bf16.msra.mxu0 0
        %682 = vmatpush.bf16.msra.mxu0 0
        %683 = vmatpush.bf16.msra.mxu0 %v436
        %684 = vmatpush.bf16.msra.mxu0 %v435
        %685 = vmatmul.bf16.gmra.mxu0 %v675
        %v686 = vpop.f32.mrf.mxu0
        %v687 = vadd.f32 0.0, %v686
        %v688 = vpop.f32.mrf.mxu0
        %689 = vdwg.mxu0
        %v690 = vadd.f32 %v670, %v687
        %v691 = vmul.f32 %v690, 0.5
        %v692 = vsel %vm419, %v690, %v691
        %v693 = vtanh.pop %v692
        %v694 = vmul.f32 %v693, 0.5
        %v695 = vadd.f32 %v694, 0.5
        %v696 = vsel %vm419, %v693, %v695
        %v697 = vmul.f32 %v696, %v661
        %699 = vrot.lane.b32.xlu0 %v696, 64
        %v700 = vpop.permute.xlu0 %699
        %v702 = vmul.f32 %v696, %v700
        %704 = vrot.lane.b32.xlu0 %v702, 32
        %v705 = vpop.permute.xlu0 %704
        %v707 = vadd.f32 %v697, %v705
        %v708 = vtanh.pop %v707
        %710 = vrot.lane.b32.xlu0 %v708, 64
        %v711 = vpop.permute.xlu0 %710
        %v713 = vmul.f32 %v696, %v711
        %v714 = vpack.c.bf16 %v713, %v713
        %s715 = scalar_lea.vmem [#allocation2], 48
        %v716 = vld [vmem:[%s715] sm:$0xff]
        %718 = vrot.lane.b32.xlu0 %v714, 32
        %v719 = vpop.permute.xlu0 %718
        %v721 = vsel %vm439, %v719, 0
        %723 = vmatpush.bf16.msra.mxu0 0
        %724 = vmatpush.bf16.msra.mxu0 0
        %725 = vmatpush.bf16.msra.mxu0 0
        %726 = vmatpush.bf16.msra.mxu0 0
        %727 = vmatpush.bf16.msra.mxu0 0
        %728 = vmatpush.bf16.msra.mxu0 0
        %729 = vmatpush.bf16.msra.mxu0 %v436
        %730 = vmatpush.bf16.msra.mxu0 %v435
        %731 = vmatmul.bf16.gmra.mxu0 %v721
        %v732 = vpop.f32.mrf.mxu0
        %v733 = vadd.f32 0.0, %v732
        %v734 = vpop.f32.mrf.mxu0
        %735 = vdwg.mxu0
        %v736 = vadd.f32 %v716, %v733
        %v737 = vmul.f32 %v736, 0.5
        %v738 = vsel %vm419, %v736, %v737
        %v739 = vtanh.pop %v738
        %v740 = vmul.f32 %v739, 0.5
        %v741 = vadd.f32 %v740, 0.5
        %v742 = vsel %vm419, %v739, %v741
        %v743 = vmul.f32 %v742, %v707
        %745 = vrot.lane.b32.xlu0 %v742, 64
        %v746 = vpop.permute.xlu0 %745
        %v748 = vmul.f32 %v742, %v746
        %750 = vrot.lane.b32.xlu0 %v748, 32
        %v751 = vpop.permute.xlu0 %750
        %v753 = vadd.f32 %v743, %v751
        %v754 = vtanh.pop %v753
        %756 = vrot.lane.b32.xlu0 %v754, 64
        %v757 = vpop.permute.xlu0 %756
        %v759 = vmul.f32 %v742, %v757
        %v760 = vpack.c.bf16 %v759, %v759
        %s761 = scalar_lea.vmem [#allocation2], 56
        %v762 = vld [vmem:[%s761] sm:$0xff]
        %764 = vrot.lane.b32.xlu0 %v760, 32
        %v765 = vpop.permute.xlu0 %764
        %v767 = vsel %vm439, %v765, 0
        %769 = vmatpush.bf16.msra.mxu0 0
        %770 = vmatpush.bf16.msra.mxu0 0
        %771 = vmatpush.bf16.msra.mxu0 0
        %772 = vmatpush.bf16.msra.mxu0 0
        %773 = vmatpush.bf16.msra.mxu0 0
        %774 = vmatpush.bf16.msra.mxu0 0
        %775 = vmatpush.bf16.msra.mxu0 %v436
        %776 = vmatpush.bf16.msra.mxu0 %v435
        %777 = vmatmul.bf16.gmra.mxu0 %v767
        %v778 = vpop.f32.mrf.mxu0
        %v779 = vadd.f32 0.0, %v778
        %v780 = vpop.f32.mrf.mxu0
        %781 = vdwg.mxu0
        %v782 = vadd.f32 %v762, %v779
        %v783 = vmul.f32 %v782, 0.5
        %v784 = vsel %vm419, %v782, %v783
        %v785 = vtanh.pop %v784
        %v786 = vmul.f32 %v785, 0.5
        %v787 = vadd.f32 %v786, 0.5
        %v788 = vsel %vm419, %v785, %v787
        %v789 = vmul.f32 %v788, %v753
        %791 = vrot.lane.b32.xlu0 %v788, 64
        %v792 = vpop.permute.xlu0 %791
        %v794 = vmul.f32 %v788, %v792
        %796 = vrot.lane.b32.xlu0 %v794, 32
        %v797 = vpop.permute.xlu0 %796
        %v799 = vadd.f32 %v789, %v797
        %v800 = vtanh.pop %v799
        %802 = vrot.lane.b32.xlu0 %v800, 64
        %v803 = vpop.permute.xlu0 %802
        %v805 = vmul.f32 %v788, %v803
        %v806 = vpack.c.bf16 %v805, %v805
        %808 = vrot.lane.b32.xlu0 %v806, 32
        %v809 = vpop.permute.xlu0 %808
        %vm811 = vcmask 257024
        %812 = vst.msk [vmem:[#allocation3] sm:$0xf] %vm811, %v809
        %814 = vrot.lane.b32.xlu0 %v799, 96
        %v815 = vpop.permute.xlu0 %814
        %817 = vst.msk [vmem:[#allocation4] sm:$0xff] %vm439, %v815
        %p818 = scmp.eq.s32.totalorder %s23, 1
        // Predicated region
        $region53: #{vanilla_lstm_forward.1} parent=47 // pred_check
          %p819 = pneg %p818
        $region54: #{vanilla_lstm_forward.1} parent=47 // pred_check_branch
          %821 = sbr.rel (%p819) target = $region56
        $region55: #{vanilla_lstm_forward.1} parent=47 // pred_region
          %v822 = vunpack.c.l.bf16 %v806
          %824 = vrot.lane.b32.xlu0 %v822, 32
          %v825 = vpop.permute.xlu0 %824
          %827 = vst.msk [vmem:[#allocation5] sm:$0xff] %vm439, %v825
          %828 = vst.msk [vmem:[#allocation7] sm:$0xff] %vm439, %v815
          %v829 = vld [vmem:[%s5] sm:$0xf]
          %v830 = vld [vmem:[%s5 + $0x4] sm:$0xf]
          %v831 = vld [vmem:[%s5 + $0x8] sm:$0xf]
          %v832 = vld [vmem:[%s5 + $0xc] sm:$0xf]
          %v833 = vld [vmem:[%s6] sm:$0x1]
          %v835 = vperm.slane %v833, 0
          %v837 = vunpack.c.l.b16 %v806
          %v838 = vpack.c.b16 %v837, %v837
          %839 = vrot.lane.b32.xlu0 %v838, 32
          %v840 = vpop.permute.xlu0 %839
          %v845 = vunpack.c.l.b16 %v829
          %v846 = vunpack.c.l.b16 %v830
          %v847 = vunpack.c.l.b16 %v831
          %v848 = vunpack.c.l.b16 %v832
          %v849 = vpack.c.b16 %v846, %v845
          %v850 = vpack.c.b16 %v848, %v847
          %v854 = vsel %vm439, %v840, 0
          %856 = vmatpush.bf16.msra.mxu0 0
          %857 = vmatpush.bf16.msra.mxu0 0
          %858 = vmatpush.bf16.msra.mxu0 0
          %859 = vmatpush.bf16.msra.mxu0 0
          %860 = vmatpush.bf16.msra.mxu0 0
          %861 = vmatpush.bf16.msra.mxu0 0
          %862 = vmatpush.bf16.msra.mxu0 %v850
          %863 = vmatpush.bf16.msra.mxu0 %v849
          %864 = vmatmul.bf16.gmra.mxu0 %v854
          %v865 = vpop.f32.mrf.mxu0
          %v866 = vadd.f32 %v835, %v865
          %v867 = vpop.f32.mrf.mxu0
          %868 = vdwg.mxu0
          %vm869 = vcmp.eq.s32.totalorder %v416, 1
          %v870 = vmax.f32 %v866, 0.0
          %vm871 = vcmp.ne.f32.partialorder %v866, %v866
          %v872 = vadd.f32 %v866, 0.0
          %v873 = vand.u32 2147483647, %v866
          %v874 = vsub.f32 0.0, %v873
          %v875 = vmul.f32 %v874, 1.442695
          %v876 = vpow.pop %v875
          %v877 = vadd.f32 %v876, 1.0
          %v878 = vlog2.pop %v877
          %v879 = vmul.f32 %v878, 0.6931472
          %v880 = vmul.f32 -0.5, %v876
          %v881 = vadd.f32 %v880, 1.0
          %v882 = vmul.f32 %v881, %v876
          %v883 = vand.u32 2147483647, %v876
          %vm884 = vcmp.lt.f32.partialorder %v883, 0.0004427343
          %v885 = vsel %vm884, %v882, %v879
          %v886 = vadd.f32 %v870, %v885
          %v887 = vsel %vm871, %v872, %v886
          %v888 = vsel %vm869, %v887, %v866
          %889 = vst [vmem:[%s7] sm:$0xff] %v888
        $region56: #{vanilla_lstm_forward.1} parent=47 // pred_fallthru
          _
        // Predicated region
        $region57: #{vanilla_lstm_forward.1} parent=47 // pred_check
          %p890 = pneg %p188
        $region58: #{vanilla_lstm_forward.1} parent=47 // pred_check_branch
          %892 = sbr.rel (%p890) target = $region60
        $region59: #{vanilla_lstm_forward.1} parent=47 // pred_region
          _
        $region60: #{vanilla_lstm_forward.1} parent=47 // pred_fallthru
          _
        // Predicated region
        $region61: #{vanilla_lstm_forward.1} parent=47 // pred_check
          %p893 = pneg %p209
        $region62: #{vanilla_lstm_forward.1} parent=47 // pred_check_branch
          %895 = sbr.rel (%p893) target = $region64
        $region63: #{vanilla_lstm_forward.1} parent=47 // pred_region
          %897 = vsyncadd [#allocation6], 0
          %s899 = sshll.u32 [#allocation5], 4
          %s900 = int_to_ptr.vmem [resolvable:$true] %s899
          %s901 = sshll.u32 %s8, 4
          %s902 = int_to_ptr.hbm [resolvable:$true] %s901
          %904 = dma.vmem_to_hbm [thread:$0]  %s900, 128, %s902, [#allocation6]
        $region64: #{vanilla_lstm_forward.1} parent=47 // pred_fallthru
          _
        // Predicated region
        $region65: #{vanilla_lstm_forward.1} parent=47 // pred_check
          %p905 = pneg %p230
        $region66: #{vanilla_lstm_forward.1} parent=47 // pred_check_branch
          %907 = sbr.rel (%p905) target = $region68
        $region67: #{vanilla_lstm_forward.1} parent=47 // pred_region
          %909 = vsyncadd [#allocation8], 0
          %s911 = sshll.u32 [#allocation7], 4
          %s912 = int_to_ptr.vmem [resolvable:$true] %s911
          %s913 = sshll.u32 %s9, 4
          %s914 = int_to_ptr.hbm [resolvable:$true] %s913
          %916 = dma.vmem_to_hbm [thread:$0]  %s912, 128, %s914, [#allocation8]
        $region68: #{vanilla_lstm_forward.1} parent=47 // pred_fallthru
          _
        // Predicated region
        $region69: #{vanilla_lstm_forward.1} parent=47 // pred_check
          %p917 = pneg %p188
        $region70: #{vanilla_lstm_forward.1} parent=47 // pred_check_branch
          %919 = sbr.rel (%p917) target = $region72
        $region71: #{vanilla_lstm_forward.1} parent=47 // pred_region
          _
        $region72: #{vanilla_lstm_forward.1} parent=47 // pred_fallthru
          _
        // Predicated region
        $region73: #{vanilla_lstm_forward.1} parent=47 // pred_check
          %p920 = pneg %p209
        $region74: #{vanilla_lstm_forward.1} parent=47 // pred_check_branch
          %922 = sbr.rel (%p920) target = $region76
        $region75: #{vanilla_lstm_forward.1} parent=47 // pred_region
          %924 = dma.done [#allocation6], 128
        $region76: #{vanilla_lstm_forward.1} parent=47 // pred_fallthru
          _
        // Predicated region
        $region77: #{vanilla_lstm_forward.1} parent=47 // pred_check
          %p925 = pneg %p230
        $region78: #{vanilla_lstm_forward.1} parent=47 // pred_check_branch
          %927 = sbr.rel (%p925) target = $region80
        $region79: #{vanilla_lstm_forward.1} parent=47 // pred_region
          %929 = dma.done [#allocation8], 128
        $region80: #{vanilla_lstm_forward.1} parent=47 // pred_fallthru
          _
      $region48: #{vanilla_lstm_forward.1} parent=5 // pred_fallthru
        _
      %p930 = scmp.le.s32.totalorder 2, %s18
      // Predicated region
      $region81: #{vanilla_lstm_forward.1} parent=5 // pred_check
        %p931 = pneg %p930
      $region82: #{vanilla_lstm_forward.1} parent=5 // pred_check_branch
        %933 = sbr.rel (%p931) target = $region84
      $region83: #{vanilla_lstm_forward.1} parent=5 // pred_region
        %s934 = ssub.s32 %s18, 2
      $region84: #{vanilla_lstm_forward.1} parent=5 // pred_fallthru
        _
    $region6: #{vanilla_lstm_forward.1} parent=1 // loop_footer
      %s22 = sadd.s32 1, %s18
    $region7: #{vanilla_lstm_forward.1} parent=1 // loop_footer_branch
      %17 = sbr.rel target = $region3
    $region8: #{vanilla_lstm_forward.1} parent=1 // loop_exit
      _
    %935 = vsyncpa [#allocation6], 1
    %s936 = scalar_lea.sflag [#allocation6], 1
    %937 = vsyncpa %s936, 1
    %938 = vsyncpa [#allocation8], 1

</llo_original>
